<compile_context>
chip_gen: v7x
topology: tpu7x:2x2x1
jax: 0.10.0
libtpu: 0.0.40
codegen_flags: <defaults>
</compile_context>

<pallas_src>
import functools
import math

import jax
import jax.numpy as jnp
import numpy as np
from jax import lax
from jax.experimental import pallas as pl
from jax.experimental.pallas import tpu as pltpu


def _pam_flash_kernel(n_valid, mask_keys,
                      gamma_ref,            # (1,) f32 scalar prefetch (SMEM)
                      q_ref,                # (TQ, C8)  bf16
                      kT_ref,               # (C8, TK)  bf16  (pre-transposed key)
                      v_ref,                # (TK, C)   bf16
                      x_ref,                # (TQ, C)   f32   (residual)
                      out_ref,              # (TQ, C)
                      m_sc, l_sc, acc_sc):  # VMEM scratch
    ki = pl.program_id(2)

    @pl.when(ki == 0)
    def _init():
        m_sc[...] = jnp.full(m_sc.shape, -jnp.inf, dtype=m_sc.dtype)
        l_sc[...] = jnp.zeros(l_sc.shape, dtype=l_sc.dtype)
        acc_sc[...] = jnp.zeros(acc_sc.shape, dtype=acc_sc.dtype)

    # Energy tile: plain NN matmul, bf16 operands, f32 accumulation, TK lane-dense.
    s = jnp.dot(q_ref[...], kT_ref[...], preferred_element_type=jnp.float32)  # (TQ, TK)

    if mask_keys:  # static: only emitted when N was padded
        tk = s.shape[-1]
        col = ki * tk + lax.broadcasted_iota(jnp.int32, s.shape, 1)
        s = jnp.where(col < n_valid, s, -jnp.inf)

    # Online softmax update (f32 vector math; no bf16 VPU/EUP ops -> fine on v5e).
    m_prev = m_sc[...]
    m_new = jnp.maximum(m_prev, jnp.max(s, axis=-1, keepdims=True))
    alpha = jnp.exp(m_prev - m_new)
    p = jnp.exp(s - m_new)
    l_sc[...] = alpha * l_sc[...] + jnp.sum(p, axis=-1, keepdims=True)
    acc_sc[...] = alpha * acc_sc[...] + jnp.dot(
        p.astype(v_ref.dtype), v_ref[...], preferred_element_type=jnp.float32)  # (TQ, C)
    m_sc[...] = m_new

    @pl.when(ki == pl.num_programs(2) - 1)
    def _finalize():
        gamma = gamma_ref[0]
        inv_l = pl.reciprocal(l_sc[...], approx=True)                 # EUP vrcp
        out = gamma * (acc_sc[...] * inv_l) + x_ref[...].astype(jnp.float32)
        out_ref[...] = out.astype(out_ref.dtype)


def _round_up(x, m):
    return ((x + m - 1) // m) * m


def _choose_tile(n, target=512):
    """Tile that is a multiple of 128 (lane-dense s/p tiles); N is padded to fit."""
    return min(target, _round_up(n, 128))


def _vmem_bytes_estimate(tq, tk, c, c8):
    bf16, f32, dbuf = 2, 4, 2
    stream = dbuf * (tq * c8 * bf16 + c8 * tk * bf16 + tk * c * bf16
                     + tq * c * f32 + tq * c * f32)   # q, k^T, v, x, out tiles
    scratch = tq * c * f32 + 2 * tq * f32             # acc + running max/sum
    return stream + scratch


def pam_module(x_nchw, wq, bq, wk, bk, wv, bv, gamma, *, tq=None, tk=None):
    """x_nchw: (B, C, H, W) f32. Weights are (C_in, C_out) matrices, biases (1, C_out).
    gamma is a scalar (nn.Parameter(torch.zeros(1)))."""
    B, C, H, W = x_nchw.shape
    N = H * W
    C8 = wq.shape[1]

    tq = _choose_tile(N) if tq is None else tq
    tk = _choose_tile(N) if tk is None else tk
    n_pad = _round_up(N, math.lcm(tq, tk))
    assert tq % 8 == 0, "tq must be a multiple of 8"
    assert tk % 128 == 0 or tk == n_pad, "tk must be a multiple of 128 (or all of N)"

    # NCHW -> (B, N, C), n = h*W + w (matches torch's .view(B, C, H*W)).
    # TODO(synk): if the surrounding model can stay channels-last (B, N, C) end-to-end,
    # drop this transpose and the final one -- each is a full HBM round trip of x/out.
    x_bnc = jnp.transpose(x_nchw.reshape(B, C, N), (0, 2, 1)).astype(jnp.float32)

    # Projections hoisted out of the kernel (1x1 conv == channel matmul): computed
    # ONCE here instead of nq times per key tile inside the inner loop.
    xb = x_bnc.astype(jnp.bfloat16)
    q = (jnp.einsum("bnc,ck->bnk", xb, wq.astype(jnp.bfloat16),
                    preferred_element_type=jnp.float32) + bq).astype(jnp.bfloat16)
    k = (jnp.einsum("bnc,ck->bnk", xb, wk.astype(jnp.bfloat16),
                    preferred_element_type=jnp.float32) + bk).astype(jnp.bfloat16)
    v = (jnp.einsum("bnc,cd->bnd", xb, wv.astype(jnp.bfloat16),
                    preferred_element_type=jnp.float32) + bv).astype(jnp.bfloat16)
    # Pre-transpose K (only the small (B, N, C8) tensor) so the energy matmul is NN.
    k_t = jnp.transpose(k, (0, 2, 1))                                   # (B, C8, N)

    # Pad N to a tile multiple; padded key columns are masked to -inf in-kernel,
    # padded query rows are sliced off below.
    if n_pad != N:
        pad = n_pad - N
        q = jnp.pad(q, ((0, 0), (0, pad), (0, 0)))
        k_t = jnp.pad(k_t, ((0, 0), (0, 0), (0, pad)))
        v = jnp.pad(v, ((0, 0), (0, pad), (0, 0)))
        x_res = jnp.pad(x_bnc, ((0, 0), (0, pad), (0, 0)))
    else:
        x_res = x_bnc

    gamma1 = jnp.reshape(gamma, (1,)).astype(jnp.float32)
    nq, nk = n_pad // tq, n_pad // tk

    # Kernel-side cost only (projections now live in the wrapper); the kv stream is
    # re-read nq times, q/x/out streams once.
    bytes_accessed = (B * n_pad * C8 * 2                 # q
                      + B * n_pad * C8 * 2 * nq          # k^T, re-read per query tile
                      + B * n_pad * C * 2 * nq           # v,   re-read per query tile
                      + B * n_pad * C * 4                # residual x
                      + B * n_pad * C * 4)               # out
    cost = pl.CostEstimate(
        flops=int(2 * B * n_pad * n_pad * (C8 + C)),
        transcendentals=int(B * n_pad * n_pad + 2 * B * n_pad * nk),
        bytes_accessed=int(bytes_accessed),
    )

    vmem_limit = int(min(48 << 20, max(32 << 20, 2 * _vmem_bytes_estimate(tq, tk, C, C8))))
    kernel = functools.partial(_pam_flash_kernel, N, n_pad != N)

    out_bnc = pl.pallas_call(
        kernel,
        out_shape=jax.ShapeDtypeStruct((B, n_pad, C), x_bnc.dtype),
        grid_spec=pltpu.PrefetchScalarGridSpec(
            num_scalar_prefetch=1,                       # gamma -> SMEM scalar
            grid=(B, nq, nk),                            # reduction (key tiles) last
            in_specs=[
                pl.BlockSpec((None, tq, C8), lambda b, qi, ki, g: (b, qi, 0)),  # q
                pl.BlockSpec((None, C8, tk), lambda b, qi, ki, g: (b, 0, ki)),  # k^T
                pl.BlockSpec((None, tk, C),  lambda b, qi, ki, g: (b, ki, 0)),  # v
                pl.BlockSpec((None, tq, C),  lambda b, qi, ki, g: (b, qi, 0)),  # x residual
            ],
            out_specs=pl.BlockSpec((None, tq, C), lambda b, qi, ki, g: (b, qi, 0)),
            scratch_shapes=[
                pltpu.VMEM((tq, 1), jnp.float32),        # running max
                pltpu.VMEM((tq, 1), jnp.float32),        # running sum
                pltpu.VMEM((tq, C), jnp.float32),        # output accumulator
            ],
        ),
        compiler_params=pltpu.CompilerParams(
            dimension_semantics=("parallel", "parallel", "arbitrary"),
            vmem_limit_bytes=vmem_limit),
        cost_estimate=cost,
    )(gamma1, q, k_t, v, x_res)

    out_bnc = out_bnc[:, :N, :]
    return jnp.transpose(out_bnc, (0, 2, 1)).reshape(B, C, H, W)


def _reference(x_nchw, wq, bq, wk, bk, wv, bv, gamma):
    B, C, H, W = x_nchw.shape
    N = H * W
    x = jnp.transpose(x_nchw.reshape(B, C, N), (0, 2, 1))            # (B, N, C)
    q = x @ wq + bq                                                  # (B, N, C8)
    k = x @ wk + bk                                                  # (B, N, C8)
    v = x @ wv + bv                                                  # (B, N, C)
    energy = jnp.einsum("bic,bjc->bij", q, k)                        # (B, N, N)
    attn = jax.nn.softmax(energy, axis=-1)
    out = jnp.einsum("bij,bjc->bic", attn, v)                        # (B, N, C)
    out = gamma * out + x
    return jnp.transpose(out, (0, 2, 1)).reshape(B, C, H, W)


if __name__ == "__main__":
    key = jax.random.PRNGKey(0)
    B, C, H, W = 2, 16, 16, 16        # in_dim = 16 -> C//8 = 2; N = 256
    C8 = C // 8

    k_x, k_wq, k_bq, k_wk, k_bk, k_wv, k_bv, k_x2 = jax.random.split(key, 8)
    x = jax.random.normal(k_x, (B, C, H, W), dtype=jnp.float32)

    # Deterministic synthetic parameters (1x1 conv weights stored as (C_in, C_out)).
    wq = jax.random.normal(k_wq, (C, C8), dtype=jnp.float32) * 0.1
    bq = jax.random.normal(k_bq, (1, C8), dtype=jnp.float32) * 0.1
    wk = jax.random.normal(k_wk, (C, C8), dtype=jnp.float32) * 0.1
    bk = jax.random.normal(k_bk, (1, C8), dtype=jnp.float32) * 0.1
    wv = jax.random.normal(k_wv, (C, C), dtype=jnp.float32) * 0.1
    bv = jax.random.normal(k_bv, (1, C), dtype=jnp.float32) * 0.1
    # nn.Parameter(torch.zeros(1)) -> gamma starts at 0; use a nonzero deterministic
    # value here so the attention path is actually exercised.
    gamma = jnp.float32(0.5)

    # Case 1: tq=tk=128 with N=256 exercises the multi-key-tile online-softmax path.
    out = pam_module(x, wq, bq, wk, bk, wv, bv, gamma, tq=128, tk=128)
    out = jax.block_until_ready(out)
    ref = _reference(x, wq, bq, wk, bk, wv, bv, gamma)
    # Tolerance loosened vs. pure-f32 because all MXU matmuls use bf16 operands.
    np.testing.assert_allclose(np.asarray(out), np.asarray(ref), rtol=2e-2, atol=2e-2)

    # Case 2: H=W=10 (N=100) exercises the padded/masked-key path (N padded to 128).
    x2 = jax.random.normal(k_x2, (1, C, 10, 10), dtype=jnp.float32)
    out2 = pam_module(x2, wq, bq, wk, bk, wv, bv, gamma)
    out2 = jax.block_until_ready(out2)
    ref2 = _reference(x2, wq, bq, wk, bk, wv, bv, gamma)
    np.testing.assert_allclose(np.asarray(out2), np.asarray(ref2), rtol=2e-2, atol=2e-2)

    print("KERNEL_OK")
</pallas_src>

<mosaic_0001>
module attributes {stable_mosaic.version = 11 : i64} {
  func.func @_pam_flash_kernel(%arg0: i32, %arg1: i32, %arg2: i32, %arg3: memref<1xf32, #tpu.memory_space<smem>>, %arg4: memref<1x128x2xbf16, #tpu.memory_space<vmem>>, %arg5: memref<1x2x128xbf16, #tpu.memory_space<vmem>>, %arg6: memref<1x128x16xbf16, #tpu.memory_space<vmem>>, %arg7: memref<1x128x16xf32, #tpu.memory_space<vmem>>, %arg8: memref<1x128x16xf32, #tpu.memory_space<vmem>>, %arg9: memref<128x1xf32, #tpu.memory_space<vmem>>, %arg10: memref<128x1xf32, #tpu.memory_space<vmem>>, %arg11: memref<128x16xf32, #tpu.memory_space<vmem>>) attributes {dimension_semantics = [#tpu.dimension_semantics<parallel>, #tpu.dimension_semantics<parallel>, #tpu.dimension_semantics<arbitrary>], iteration_bounds = array<i64: 2, 2, 2>, scalar_prefetch = 1 : i64, scratch_operands = 3 : i64, tpu.core_type = #tpu.core_type<tc>, window_params = [{transform_indices = @transform_0, window_bounds = array<i64: 1, 128, 2>}, {transform_indices = @transform_1, window_bounds = array<i64: 1, 2, 128>}, {transform_indices = @transform_2, window_bounds = array<i64: 1, 128, 16>}, {transform_indices = @transform_3, window_bounds = array<i64: 1, 128, 16>}, {transform_indices = @transform_4, window_bounds = array<i64: 1, 128, 16>}]} {
    %c0_i32 = arith.constant 0 : i32
    %0 = arith.cmpi eq, %arg2, %c0_i32 : i32
    %1 = arith.extui %0 : i1 to i32
    %c0_i32_0 = arith.constant 0 : i32
    %2 = arith.cmpi ne, %1, %c0_i32_0 : i32
    scf.if %2 {
      %cst_25 = arith.constant 0xFF800000 : f32
      %36 = vector.broadcast %cst_25 : f32 to vector<128x1xf32>
      %c0_26 = arith.constant 0 : index
      %c0_27 = arith.constant 0 : index
      %37 = vector.load %arg9[%c0_26, %c0_27] : memref<128x1xf32, #tpu.memory_space<vmem>>, vector<128x1xf32>
      tpu.vector_store %arg9[%c0_26, %c0_27], %36 {strides = array<i32>} : memref<128x1xf32, #tpu.memory_space<vmem>>, vector<128x1xf32>,
      %cst_28 = arith.constant 0.000000e+00 : f32
      %38 = vector.broadcast %cst_28 : f32 to vector<128x1xf32>
      %c0_29 = arith.constant 0 : index
      %c0_30 = arith.constant 0 : index
      %39 = vector.load %arg10[%c0_29, %c0_30] : memref<128x1xf32, #tpu.memory_space<vmem>>, vector<128x1xf32>
      tpu.vector_store %arg10[%c0_29, %c0_30], %38 {strides = array<i32>} : memref<128x1xf32, #tpu.memory_space<vmem>>, vector<128x1xf32>,
      %cst_31 = arith.constant 0.000000e+00 : f32
      %40 = vector.broadcast %cst_31 : f32 to vector<128x16xf32>
      %c0_32 = arith.constant 0 : index
      %c0_33 = arith.constant 0 : index
      %41 = vector.load %arg11[%c0_32, %c0_33] : memref<128x16xf32, #tpu.memory_space<vmem>>, vector<128x16xf32>
      tpu.vector_store %arg11[%c0_32, %c0_33], %40 {strides = array<i32>} : memref<128x16xf32, #tpu.memory_space<vmem>>, vector<128x16xf32>,
    } else {
    }
    %c0 = arith.constant 0 : index
    %c0_1 = arith.constant 0 : index
    %c0_2 = arith.constant 0 : index
    %3 = vector.load %arg4[%c0, %c0_1, %c0_2] : memref<1x128x2xbf16, #tpu.memory_space<vmem>>, vector<1x128x2xbf16>
    %4 = vector.shape_cast %3 : vector<1x128x2xbf16> to vector<128x2xbf16>
    %c0_3 = arith.constant 0 : index
    %c0_4 = arith.constant 0 : index
    %c0_5 = arith.constant 0 : index
    %5 = vector.load %arg5[%c0_3, %c0_4, %c0_5] : memref<1x2x128xbf16, #tpu.memory_space<vmem>>, vector<1x2x128xbf16>
    %6 = vector.shape_cast %5 : vector<1x2x128xbf16> to vector<2x128xbf16>
    %cst = arith.constant dense<0.000000e+00> : vector<128x128xf32>
    %7 = tpu.matmul %4, %6, %cst {dimension_numbers = #tpu.dot_dimension_numbers<[1], [0], [0], [1], [0, 0, 1, 1], [], []>} : vector<128x2xbf16>, vector<2x128xbf16>, vector<128x128xf32> -> vector<128x128xf32>
    %c0_6 = arith.constant 0 : index
    %c0_7 = arith.constant 0 : index
    %8 = vector.load %arg9[%c0_6, %c0_7] : memref<128x1xf32, #tpu.memory_space<vmem>>, vector<128x1xf32>
    %cst_8 = arith.constant dense<0xFF800000> : vector<128xf32>
    %9 = vector.multi_reduction <maximumf>, %7, %cst_8 [1] : vector<128x128xf32> to vector<128xf32>
    %10 = vector.shape_cast %9 : vector<128xf32> to vector<128x1xf32>
    %11 = arith.maximumf %8, %10 : vector<128x1xf32>
    %12 = arith.subf %8, %11 : vector<128x1xf32>
    %13 = math.exp %12 : vector<128x1xf32>
    %14 = vector.broadcast %11 : vector<128x1xf32> to vector<128x128xf32>
    %15 = arith.subf %7, %14 : vector<128x128xf32>
    %16 = math.exp %15 : vector<128x128xf32>
    %c0_9 = arith.constant 0 : index
    %c0_10 = arith.constant 0 : index
    %17 = vector.load %arg10[%c0_9, %c0_10] : memref<128x1xf32, #tpu.memory_space<vmem>>, vector<128x1xf32>
    %18 = arith.mulf %13, %17 : vector<128x1xf32>
    %cst_11 = arith.constant dense<0.000000e+00> : vector<128xf32>
    %19 = vector.multi_reduction <add>, %16, %cst_11 [1] : vector<128x128xf32> to vector<128xf32>
    %20 = vector.shape_cast %19 : vector<128xf32> to vector<128x1xf32>
    %21 = arith.addf %18, %20 : vector<128x1xf32>
    %c0_12 = arith.constant 0 : index
    %c0_13 = arith.constant 0 : index
    %22 = vector.load %arg10[%c0_12, %c0_13] : memref<128x1xf32, #tpu.memory_space<vmem>>, vector<128x1xf32>
    tpu.vector_store %arg10[%c0_12, %c0_13], %21 {strides = array<i32>} : memref<128x1xf32, #tpu.memory_space<vmem>>, vector<128x1xf32>,
    %c0_14 = arith.constant 0 : index
    %c0_15 = arith.constant 0 : index
    %23 = vector.load %arg11[%c0_14, %c0_15] : memref<128x16xf32, #tpu.memory_space<vmem>>, vector<128x16xf32>
    %24 = vector.broadcast %13 : vector<128x1xf32> to vector<128x16xf32>
    %25 = arith.mulf %24, %23 : vector<128x16xf32>
    %26 = arith.truncf %16 : vector<128x128xf32> to vector<128x128xbf16>
    %c0_16 = arith.constant 0 : index
    %c0_17 = arith.constant 0 : index
    %c0_18 = arith.constant 0 : index
    %27 = vector.load %arg6[%c0_16, %c0_17, %c0_18] : memref<1x128x16xbf16, #tpu.memory_space<vmem>>, vector<1x128x16xbf16>
    %28 = vector.shape_cast %27 : vector<1x128x16xbf16> to vector<128x16xbf16>
    %cst_19 = arith.constant dense<0.000000e+00> : vector<128x16xf32>
    %29 = tpu.matmul %26, %28, %cst_19 {dimension_numbers = #tpu.dot_dimension_numbers<[1], [0], [0], [1], [0, 0, 1, 1], [], []>} : vector<128x128xbf16>, vector<128x16xbf16>, vector<128x16xf32> -> vector<128x16xf32>
    %30 = arith.addf %25, %29 : vector<128x16xf32>
    %c0_20 = arith.constant 0 : index
    %c0_21 = arith.constant 0 : index
    %31 = vector.load %arg11[%c0_20, %c0_21] : memref<128x16xf32, #tpu.memory_space<vmem>>, vector<128x16xf32>
    tpu.vector_store %arg11[%c0_20, %c0_21], %30 {strides = array<i32>} : memref<128x16xf32, #tpu.memory_space<vmem>>, vector<128x16xf32>,
    %c0_22 = arith.constant 0 : index
    %c0_23 = arith.constant 0 : index
    %32 = vector.load %arg9[%c0_22, %c0_23] : memref<128x1xf32, #tpu.memory_space<vmem>>, vector<128x1xf32>
    tpu.vector_store %arg9[%c0_22, %c0_23], %11 {strides = array<i32>} : memref<128x1xf32, #tpu.memory_space<vmem>>, vector<128x1xf32>,
    %c1_i32 = arith.constant 1 : i32
    %33 = arith.cmpi eq, %arg2, %c1_i32 : i32
    %34 = arith.extui %33 : i1 to i32
    %c0_i32_24 = arith.constant 0 : i32
    %35 = arith.cmpi ne, %34, %c0_i32_24 : i32
    scf.if %35 {
      %c0_25 = arith.constant 0 : index
      %36 = memref.load %arg3[%c0_25] : memref<1xf32, #tpu.memory_space<smem>>
      %c0_26 = arith.constant 0 : index
      %c0_27 = arith.constant 0 : index
      %37 = vector.load %arg10[%c0_26, %c0_27] : memref<128x1xf32, #tpu.memory_space<vmem>>, vector<128x1xf32>
      %38 = tpu.reciprocal %37 {approx = true} : vector<128x1xf32> -> vector<128x1xf32>
      %c0_28 = arith.constant 0 : index
      %c0_29 = arith.constant 0 : index
      %39 = vector.load %arg11[%c0_28, %c0_29] : memref<128x16xf32, #tpu.memory_space<vmem>>, vector<128x16xf32>
      %40 = vector.broadcast %38 : vector<128x1xf32> to vector<128x16xf32>
      %41 = arith.mulf %39, %40 : vector<128x16xf32>
      %42 = vector.broadcast %36 : f32 to vector<128x16xf32>
      %43 = arith.mulf %42, %41 : vector<128x16xf32>
      %c0_30 = arith.constant 0 : index
      %c0_31 = arith.constant 0 : index
      %c0_32 = arith.constant 0 : index
      %44 = vector.load %arg7[%c0_30, %c0_31, %c0_32] : memref<1x128x16xf32, #tpu.memory_space<vmem>>, vector<1x128x16xf32>
      %45 = vector.shape_cast %44 : vector<1x128x16xf32> to vector<128x16xf32>
      %46 = arith.addf %43, %45 : vector<128x16xf32>
      %c0_33 = arith.constant 0 : index
      %c0_34 = arith.constant 0 : index
      %c0_35 = arith.constant 0 : index
      %47 = vector.load %arg8[%c0_33, %c0_34, %c0_35] : memref<1x128x16xf32, #tpu.memory_space<vmem>>, vector<1x128x16xf32>
      %48 = vector.shape_cast %47 : vector<1x128x16xf32> to vector<128x16xf32>
      %49 = vector.shape_cast %46 : vector<128x16xf32> to vector<1x128x16xf32>
      tpu.vector_store %arg8[%c0_33, %c0_34, %c0_35], %49 {strides = array<i32>} : memref<1x128x16xf32, #tpu.memory_space<vmem>>, vector<1x128x16xf32>,
    } else {
    }
    return
  }
  func.func @transform_0(%arg0: i32, %arg1: i32, %arg2: i32, %arg3: memref<1xf32, #tpu.memory_space<smem>>) -> (i32, i32, i32) {
    %c0_i32 = arith.constant 0 : i32
    %c0_i32_0 = arith.constant 0 : i32
    return %arg0, %arg1, %c0_i32 : i32, i32, i32
  }
  func.func @transform_1(%arg0: i32, %arg1: i32, %arg2: i32, %arg3: memref<1xf32, #tpu.memory_space<smem>>) -> (i32, i32, i32) {
    %c0_i32 = arith.constant 0 : i32
    %c0_i32_0 = arith.constant 0 : i32
    return %arg0, %c0_i32, %arg2 : i32, i32, i32
  }
  func.func @transform_2(%arg0: i32, %arg1: i32, %arg2: i32, %arg3: memref<1xf32, #tpu.memory_space<smem>>) -> (i32, i32, i32) {
    %c0_i32 = arith.constant 0 : i32
    %c0_i32_0 = arith.constant 0 : i32
    return %arg0, %arg2, %c0_i32 : i32, i32, i32
  }
  func.func @transform_3(%arg0: i32, %arg1: i32, %arg2: i32, %arg3: memref<1xf32, #tpu.memory_space<smem>>) -> (i32, i32, i32) {
    %c0_i32 = arith.constant 0 : i32
    %c0_i32_0 = arith.constant 0 : i32
    return %arg0, %arg1, %c0_i32 : i32, i32, i32
  }
  func.func @transform_4(%arg0: i32, %arg1: i32, %arg2: i32, %arg3: memref<1xf32, #tpu.memory_space<smem>>) -> (i32, i32, i32) {
    %c0_i32 = arith.constant 0 : i32
    %c0_i32_0 = arith.constant 0 : i32
    return %arg0, %arg1, %c0_i32 : i32, i32, i32
  }
}

</mosaic_0001>

<llo_original>
// kernel: tpu_custom_call.1
$region0: #{tpu_custom_call.1}
  #allocation0 [shape = 'u32[]', space=smem, size = 0x4, offset = 0x4, fixed_abs, tag = 'smem constant byte address 0x4 - core index']
  #allocation1 [shape = 'u32[144,128]{1,0:T(1,128)}', space=vmem, size = 0x12000, scoped, tag = 'internal scratch']
  #allocation2 [shape = 'f32[128,1]{1,0:T(8,128)}', space=vmem, size = 0x10000, scoped, tag = 'scratch operand']
  #allocation3 [shape = 'f32[128,1]{1,0:T(8,128)}', space=vmem, size = 0x10000, scoped, tag = 'scratch operand']
  #allocation4 [shape = 'f32[128,16]{1,0:T(8,128)}', space=vmem, size = 0x10000, scoped, tag = 'scratch operand']
  #allocation5 [shape = 's32[1]{0}', space=sflag, size = 0x4, scoped, tag = 'scoped memory for tpu_custom_call.1']
  #allocation6 [shape = 'f32[1]{0:T(128)S(6)}', space=smem, size = 0x200, scoped, tag = 'prefetched SMEM operand 0']
  %s0 = inlined_call_operand.<no memory space> [shape: f32[1], index: 0, kind: input, shape index: {}]
  %s1 = inlined_call_operand.vmem [shape: bf16[2,256,2], index: 1, kind: input, shape index: {}]
  %s2 = inlined_call_operand.vmem [shape: bf16[2,2,256], index: 2, kind: input, shape index: {}]
  %s3 = inlined_call_operand.vmem [shape: bf16[2,256,16], index: 3, kind: input, shape index: {}]
  %s4 = inlined_call_operand.vmem [shape: f32[2,256,16], index: 4, kind: input, shape index: {}]
  %s5 = inlined_call_operand.vmem [shape: f32[2,256,16], index: 5, kind: output, shape index: {}]
  %s6 = sld [smem:[#allocation0]]
  $region57: #{tpu_custom_call.1} parent=0
    _
  %s8 = ssub.s32 1, %s6
  %s9 = scalar_select 0, %s8, %s6
  %10 = sst [smem:[#allocation6]] %s0
  loop: start=0, step=1, limit=10
  $region2: #{tpu_custom_call.1} parent=0 // loop_pre_header
    _
  $region3: #{tpu_custom_call.1} parent=0 // loop_header
    %s12 = sphi 0, %s16
    %p13 = scmp.ge.s32.totalorder %s12, 10
    %s19 = sphi 0, %s38
    %s20 = sphi 0, %s34
    %s21 = sphi 0, %s30
    %s22 = sphi 0, %s19
    %s23 = sphi 0, %s20
    %s24 = sphi 0, %s21
    %s25 = sphi 0, %s22
    %s26 = sphi 0, %s23
    %s27 = sphi 0, %s24
    %s43 = sphi 0, %s45
    %s46 = sphi 0, %s43
    %s47 = sphi 0, %s46
    %s63 = sphi 0, %s47
    %s71 = sphi 0, %s73
    %s74 = sphi 0, %s71
    %s75 = sphi 0, %s74
    %s91 = sphi 0, %s75
    %s99 = sphi 0, %s101
    %s102 = sphi 0, %s99
    %s103 = sphi 0, %s102
    %s119 = sphi 0, %s103
    %s127 = sphi 0, %s129
    %s130 = sphi 0, %s127
    %s131 = sphi 0, %s130
    %s147 = sphi 0, %s131
    %s155 = sphi 0, %s157
    %s158 = sphi 0, %s155
    %s159 = sphi 0, %s158
    %s175 = sphi 0, %s159
  $region4: #{tpu_custom_call.1} parent=0 // loop_header_branch
    %15 = sbr.rel (%p13) target = $region8
  $region5: #{tpu_custom_call.1} parent=0 // loop_body
    %s17 = ssub.s32 %s12, 1
    %s18 = ssub.s32 %s12, 2
    %s28 = sadd.s32 1, %s21
    %p29 = scmp.ge.s32.totalorder %s28, 2
    %s30 = scalar_select %p29, 0, %s28
    %s31 = sadd.s32 1, %s20
    %s32 = scalar_select %p29, %s31, %s20
    %p33 = scmp.ge.s32.totalorder %s32, 2
    %s34 = scalar_select %p33, 0, %s32
    %s35 = sadd.s32 1, %s19
    %s36 = scalar_select %p33, %s35, %s19
    %p37 = scmp.ge.s32.totalorder %s36, 2
    %s38 = scalar_select %p37, 0, %s36
    %s39 = ssub.s32 %s19, %s38
    %s40 = ssub.s32 %s20, %s34
    %s41 = sor.u32 %s39, %s40
    %p42 = scmp.eq.s32.totalorder %s41, 0
    %s44 = sadd.s32 %s43, 1
    %s45 = scalar_select %p42, %s43, %s44
    %p48 = pneg %p42
    %p49 = scmp.eq.s32.totalorder %s12, 7
    %p50 = por %p48, %p49
    %p51 = scmp.ne.s32.totalorder %s43, %s46
    %p52 = scmp.eq.s32.totalorder %s12, 0
    %p53 = por %p51, %p52
    %p54 = scmp.ne.s32.totalorder %s43, %s46
    %p55 = scmp.eq.s32.totalorder %s17, 7
    %p56 = por %p54, %p55
    %p57 = scmp.ne.s32.totalorder %s46, %s47
    %p58 = scmp.eq.s32.totalorder %s17, 0
    %p59 = por %p57, %p58
    %p60 = scmp.ne.s32.totalorder %s46, %s47
    %p61 = scmp.eq.s32.totalorder %s18, 7
    %p62 = por %p60, %p61
    %p64 = scmp.ne.s32.totalorder %s47, %s63
    %p65 = scmp.eq.s32.totalorder %s18, 0
    %p66 = por %p64, %p65
    %s67 = ssub.s32 %s19, %s38
    %s68 = ssub.s32 %s21, %s30
    %s69 = sor.u32 %s67, %s68
    %p70 = scmp.eq.s32.totalorder %s69, 0
    %s72 = sadd.s32 %s71, 1
    %s73 = scalar_select %p70, %s71, %s72
    %p76 = pneg %p70
    %p77 = scmp.eq.s32.totalorder %s12, 7
    %p78 = por %p76, %p77
    %p79 = scmp.ne.s32.totalorder %s71, %s74
    %p80 = scmp.eq.s32.totalorder %s12, 0
    %p81 = por %p79, %p80
    %p82 = scmp.ne.s32.totalorder %s71, %s74
    %p83 = scmp.eq.s32.totalorder %s17, 7
    %p84 = por %p82, %p83
    %p85 = scmp.ne.s32.totalorder %s74, %s75
    %p86 = scmp.eq.s32.totalorder %s17, 0
    %p87 = por %p85, %p86
    %p88 = scmp.ne.s32.totalorder %s74, %s75
    %p89 = scmp.eq.s32.totalorder %s18, 7
    %p90 = por %p88, %p89
    %p92 = scmp.ne.s32.totalorder %s75, %s91
    %p93 = scmp.eq.s32.totalorder %s18, 0
    %p94 = por %p92, %p93
    %s95 = ssub.s32 %s19, %s38
    %s96 = ssub.s32 %s21, %s30
    %s97 = sor.u32 %s95, %s96
    %p98 = scmp.eq.s32.totalorder %s97, 0
    %s100 = sadd.s32 %s99, 1
    %s101 = scalar_select %p98, %s99, %s100
    %p104 = pneg %p98
    %p105 = scmp.eq.s32.totalorder %s12, 7
    %p106 = por %p104, %p105
    %p107 = scmp.ne.s32.totalorder %s99, %s102
    %p108 = scmp.eq.s32.totalorder %s12, 0
    %p109 = por %p107, %p108
    %p110 = scmp.ne.s32.totalorder %s99, %s102
    %p111 = scmp.eq.s32.totalorder %s17, 7
    %p112 = por %p110, %p111
    %p113 = scmp.ne.s32.totalorder %s102, %s103
    %p114 = scmp.eq.s32.totalorder %s17, 0
    %p115 = por %p113, %p114
    %p116 = scmp.ne.s32.totalorder %s102, %s103
    %p117 = scmp.eq.s32.totalorder %s18, 7
    %p118 = por %p116, %p117
    %p120 = scmp.ne.s32.totalorder %s103, %s119
    %p121 = scmp.eq.s32.totalorder %s18, 0
    %p122 = por %p120, %p121
    %s123 = ssub.s32 %s19, %s38
    %s124 = ssub.s32 %s20, %s34
    %s125 = sor.u32 %s123, %s124
    %p126 = scmp.eq.s32.totalorder %s125, 0
    %s128 = sadd.s32 %s127, 1
    %s129 = scalar_select %p126, %s127, %s128
    %p132 = pneg %p126
    %p133 = scmp.eq.s32.totalorder %s12, 7
    %p134 = por %p132, %p133
    %p135 = scmp.ne.s32.totalorder %s127, %s130
    %p136 = scmp.eq.s32.totalorder %s12, 0
    %p137 = por %p135, %p136
    %p138 = scmp.ne.s32.totalorder %s127, %s130
    %p139 = scmp.eq.s32.totalorder %s17, 7
    %p140 = por %p138, %p139
    %p141 = scmp.ne.s32.totalorder %s130, %s131
    %p142 = scmp.eq.s32.totalorder %s17, 0
    %p143 = por %p141, %p142
    %p144 = scmp.ne.s32.totalorder %s130, %s131
    %p145 = scmp.eq.s32.totalorder %s18, 7
    %p146 = por %p144, %p145
    %p148 = scmp.ne.s32.totalorder %s131, %s147
    %p149 = scmp.eq.s32.totalorder %s18, 0
    %p150 = por %p148, %p149
    %s151 = ssub.s32 %s19, %s38
    %s152 = ssub.s32 %s20, %s34
    %s153 = sor.u32 %s151, %s152
    %p154 = scmp.eq.s32.totalorder %s153, 0
    %s156 = sadd.s32 %s155, 1
    %s157 = scalar_select %p154, %s155, %s156
    %p160 = pneg %p154
    %p161 = scmp.eq.s32.totalorder %s12, 7
    %p162 = por %p160, %p161
    %p163 = scmp.ne.s32.totalorder %s155, %s158
    %p164 = scmp.eq.s32.totalorder %s12, 0
    %p165 = por %p163, %p164
    %p166 = scmp.ne.s32.totalorder %s155, %s158
    %p167 = scmp.eq.s32.totalorder %s17, 7
    %p168 = por %p166, %p167
    %p169 = scmp.ne.s32.totalorder %s158, %s159
    %p170 = scmp.eq.s32.totalorder %s17, 0
    %p171 = por %p169, %p170
    %p172 = scmp.ne.s32.totalorder %s158, %s159
    %p173 = scmp.eq.s32.totalorder %s18, 7
    %p174 = por %p172, %p173
    %p176 = scmp.ne.s32.totalorder %s159, %s175
    %p177 = scmp.eq.s32.totalorder %s18, 0
    %p178 = por %p176, %p177
    %p179 = scmp.le.s32.totalorder 1, %s12
    %p180 = scmp.lt.s32.totalorder %s12, 9
    %p181 = pnand %p179, %p180
    %p182 = pneg %p181
    // Predicated region
    $region9: #{tpu_custom_call.1} parent=5 // pred_check
      _
    $region10: #{tpu_custom_call.1} parent=5 // pred_check_branch
      %184 = sbr.rel (%p181) target = $region12
    $region11: #{tpu_custom_call.1} parent=5 // pred_region
      %s185 = ssub.s32 %s12, 1
    $region12: #{tpu_custom_call.1} parent=5 // pred_fallthru
      _
    %p186 = scmp.lt.s32.totalorder %s12, 8
    // Predicated region
    $region13: #{tpu_custom_call.1} parent=5 // pred_check
      %p187 = pneg %p186
    $region14: #{tpu_custom_call.1} parent=5 // pred_check_branch
      %189 = sbr.rel (%p187) target = $region16
    $region15: #{tpu_custom_call.1} parent=5 // pred_region
      // Predicated region
      $region17: #{tpu_custom_call.1} parent=15 // pred_check
        %p190 = pneg %p53
      $region18: #{tpu_custom_call.1} parent=15 // pred_check_branch
        %192 = sbr.rel (%p190) target = $region20
      $region19: #{tpu_custom_call.1} parent=15 // pred_region
        %s193 = smul.u32 16, %s20
        %p194 = scmp.lt.s32.totalorder %s19, 1
        %s195 = scalar_select %p194, %s19, 1
        %p196 = scmp.lt.s32.totalorder %s193, 31
        %s197 = scalar_select %p196, %s193, 31
        %s198 = smul.addr %s195, 32
        %s199 = sadd.s32 %s197, %s198
        %s200 = smul.addr %s199, 4
        %s201 = scalar_lea.vmem %s1, %s200
        %s202 = smul.u32 16, %s20
      $region20: #{tpu_custom_call.1} parent=15 // pred_fallthru
        _
      // Predicated region
      $region21: #{tpu_custom_call.1} parent=15 // pred_check
        %p203 = pneg %p81
      $region22: #{tpu_custom_call.1} parent=15 // pred_check_branch
        %205 = sbr.rel (%p203) target = $region24
      $region23: #{tpu_custom_call.1} parent=15 // pred_region
        %p206 = scmp.lt.s32.totalorder %s19, 1
        %s207 = scalar_select %p206, %s19, 1
        %p208 = scmp.lt.s32.totalorder %s21, 1
        %s209 = scalar_select %p208, %s21, 1
        %s210 = smul.addr %s207, 2
        %s211 = sadd.s32 %s209, %s210
        %s212 = scalar_lea.vmem %s2, %s211
      $region24: #{tpu_custom_call.1} parent=15 // pred_fallthru
        _
      // Predicated region
      $region25: #{tpu_custom_call.1} parent=15 // pred_check
        %p213 = pneg %p109
      $region26: #{tpu_custom_call.1} parent=15 // pred_check_branch
        %215 = sbr.rel (%p213) target = $region28
      $region27: #{tpu_custom_call.1} parent=15 // pred_region
        %s216 = smul.u32 16, %s21
        %p217 = scmp.lt.s32.totalorder %s19, 1
        %s218 = scalar_select %p217, %s19, 1
        %p219 = scmp.lt.s32.totalorder %s216, 31
        %s220 = scalar_select %p219, %s216, 31
        %s221 = smul.addr %s218, 32
        %s222 = sadd.s32 %s220, %s221
        %s223 = smul.addr %s222, 4
        %s224 = scalar_lea.vmem %s3, %s223
        %s225 = smul.u32 16, %s21
      $region28: #{tpu_custom_call.1} parent=15 // pred_fallthru
        _
      // Predicated region
      $region29: #{tpu_custom_call.1} parent=15 // pred_check
        %p226 = pneg %p137
      $region30: #{tpu_custom_call.1} parent=15 // pred_check_branch
        %228 = sbr.rel (%p226) target = $region32
      $region31: #{tpu_custom_call.1} parent=15 // pred_region
        %s229 = smul.u32 16, %s20
        %p230 = scmp.lt.s32.totalorder %s19, 1
        %s231 = scalar_select %p230, %s19, 1
        %p232 = scmp.lt.s32.totalorder %s229, 31
        %s233 = scalar_select %p232, %s229, 31
        %s234 = smul.addr %s231, 32
        %s235 = sadd.s32 %s233, %s234
        %s236 = smul.addr %s235, 8
        %s237 = scalar_lea.vmem %s4, %s236
        %s238 = smul.u32 16, %s20
      $region32: #{tpu_custom_call.1} parent=15 // pred_fallthru
        _
    $region16: #{tpu_custom_call.1} parent=5 // pred_fallthru
      _
    %p239 = scmp.le.s32.totalorder 1, %s12
    %p240 = scmp.lt.s32.totalorder %s12, 9
    %p241 = pnand %p239, %p240
    %p242 = pneg %p241
    // Predicated region
    $region33: #{tpu_custom_call.1} parent=5 // pred_check
      _
    $region34: #{tpu_custom_call.1} parent=5 // pred_check_branch
      %244 = sbr.rel (%p241) target = $region36
    $region35: #{tpu_custom_call.1} parent=5 // pred_region
      %s245 = ssub.s32 %s12, 1
      %s246 = smul.u32 16, %s23
      %p247 = scmp.lt.s32.totalorder %s22, 1
      %s248 = scalar_select %p247, %s22, 1
      %p249 = scmp.lt.s32.totalorder %s246, 31
      %s250 = scalar_select %p249, %s246, 31
      %s251 = smul.addr %s248, 32
      %s252 = sadd.s32 %s250, %s251
      %s253 = smul.addr %s252, 4
      %s254 = scalar_lea.vmem %s1, %s253
      %p255 = pneg %p59
      %p256 = pneg %p56
      %p257 = scmp.lt.s32.totalorder %s22, 1
      %s258 = scalar_select %p257, %s22, 1
      %p259 = scmp.lt.s32.totalorder %s24, 1
      %s260 = scalar_select %p259, %s24, 1
      %s261 = smul.addr %s258, 2
      %s262 = sadd.s32 %s260, %s261
      %s263 = scalar_lea.vmem %s2, %s262
      %p264 = pneg %p87
      %p265 = pneg %p84
      %s266 = smul.u32 16, %s24
      %p267 = scmp.lt.s32.totalorder %s22, 1
      %s268 = scalar_select %p267, %s22, 1
      %p269 = scmp.lt.s32.totalorder %s266, 31
      %s270 = scalar_select %p269, %s266, 31
      %s271 = smul.addr %s268, 32
      %s272 = sadd.s32 %s270, %s271
      %s273 = smul.addr %s272, 4
      %s274 = scalar_lea.vmem %s3, %s273
      %p275 = pneg %p115
      %p276 = pneg %p112
      %s277 = smul.u32 16, %s23
      %p278 = scmp.lt.s32.totalorder %s22, 1
      %s279 = scalar_select %p278, %s22, 1
      %p280 = scmp.lt.s32.totalorder %s277, 31
      %s281 = scalar_select %p280, %s277, 31
      %s282 = smul.addr %s279, 32
      %s283 = sadd.s32 %s281, %s282
      %s284 = smul.addr %s283, 8
      %s285 = scalar_lea.vmem %s4, %s284
      %p286 = pneg %p143
      %p287 = pneg %p140
      %p288 = pneg %p171
      %p289 = pneg %p168
      %s290 = smul.u32 16, %s23
      %p291 = scmp.lt.s32.totalorder %s22, 1
      %s292 = scalar_select %p291, %s22, 1
      %p293 = scmp.lt.s32.totalorder %s290, 31
      %s294 = scalar_select %p293, %s290, 31
      %s295 = smul.addr %s292, 32
      %s296 = sadd.s32 %s294, %s295
      %s297 = smul.addr %s296, 8
      %s298 = scalar_lea.vmem %s5, %s297
      %s299 = smul.u32 16, %s23
      %p300 = scmp.lt.s32.totalorder %s22, 1
      %s301 = scalar_select %p300, %s22, 1
      %p302 = scmp.lt.s32.totalorder %s299, 31
      %s303 = scalar_select %p302, %s299, 31
      %s304 = smul.addr %s301, 32
      %s305 = sadd.s32 %s303, %s304
      %s306 = smul.addr %s305, 4
      %s307 = scalar_lea.vmem %s1, %s306
      %s308 = smul.u32 16, %s23
      %p309 = scmp.lt.s32.totalorder %s22, 1
      %s310 = scalar_select %p309, %s22, 1
      %p311 = scmp.lt.s32.totalorder %s24, 1
      %s312 = scalar_select %p311, %s24, 1
      %s313 = smul.addr %s310, 2
      %s314 = sadd.s32 %s312, %s313
      %s315 = scalar_lea.vmem %s2, %s314
      %s316 = smul.u32 16, %s24
      %p317 = scmp.lt.s32.totalorder %s22, 1
      %s318 = scalar_select %p317, %s22, 1
      %p319 = scmp.lt.s32.totalorder %s316, 31
      %s320 = scalar_select %p319, %s316, 31
      %s321 = smul.addr %s318, 32
      %s322 = sadd.s32 %s320, %s321
      %s323 = smul.addr %s322, 4
      %s324 = scalar_lea.vmem %s3, %s323
      %s325 = smul.u32 16, %s24
      %s326 = smul.u32 16, %s23
      %p327 = scmp.lt.s32.totalorder %s22, 1
      %s328 = scalar_select %p327, %s22, 1
      %p329 = scmp.lt.s32.totalorder %s326, 31
      %s330 = scalar_select %p329, %s326, 31
      %s331 = smul.addr %s328, 32
      %s332 = sadd.s32 %s330, %s331
      %s333 = smul.addr %s332, 8
      %s334 = scalar_lea.vmem %s4, %s333
      %s335 = smul.u32 16, %s23
      %s336 = smul.u32 16, %s23
      %p337 = scmp.lt.s32.totalorder %s22, 1
      %s338 = scalar_select %p337, %s22, 1
      %p339 = scmp.lt.s32.totalorder %s336, 31
      %s340 = scalar_select %p339, %s336, 31
      %s341 = smul.addr %s338, 32
      %s342 = sadd.s32 %s340, %s341
      %s343 = smul.addr %s342, 8
      %s344 = scalar_lea.vmem %s5, %s343
      %s345 = smul.u32 16, %s23
      %p347 = scmp.eq.s32.totalorder %s24, 0
      // Predicated region
      $region37: #{tpu_custom_call.1} parent=35 // pred_check
        %p348 = pneg %p347
      $region38: #{tpu_custom_call.1} parent=35 // pred_check_branch
        %350 = sbr.rel (%p348) target = $region40
      $region39: #{tpu_custom_call.1} parent=35 // pred_region
        %vm351 = vcmask 7168
        %352 = vst.msk [vmem:[#allocation2] sm:$0xff] %vm351, -inf
        %353 = vst.msk [vmem:[#allocation2 + $0x8] sm:$0xff] %vm351, -inf
        %354 = vst.msk [vmem:[#allocation2 + $0x10] sm:$0xff] %vm351, -inf
        %355 = vst.msk [vmem:[#allocation2 + $0x18] sm:$0xff] %vm351, -inf
        %356 = vst.msk [vmem:[#allocation2 + $0x20] sm:$0xff] %vm351, -inf
        %357 = vst.msk [vmem:[#allocation2 + $0x28] sm:$0xff] %vm351, -inf
        %358 = vst.msk [vmem:[#allocation2 + $0x30] sm:$0xff] %vm351, -inf
        %359 = vst.msk [vmem:[#allocation2 + $0x38] sm:$0xff] %vm351, -inf
        %360 = vst.msk [vmem:[#allocation2 + $0x40] sm:$0xff] %vm351, -inf
        %361 = vst.msk [vmem:[#allocation2 + $0x48] sm:$0xff] %vm351, -inf
        %362 = vst.msk [vmem:[#allocation2 + $0x50] sm:$0xff] %vm351, -inf
        %363 = vst.msk [vmem:[#allocation2 + $0x58] sm:$0xff] %vm351, -inf
        %364 = vst.msk [vmem:[#allocation2 + $0x60] sm:$0xff] %vm351, -inf
        %365 = vst.msk [vmem:[#allocation2 + $0x68] sm:$0xff] %vm351, -inf
        %366 = vst.msk [vmem:[#allocation2 + $0x70] sm:$0xff] %vm351, -inf
        %367 = vst.msk [vmem:[#allocation2 + $0x78] sm:$0xff] %vm351, -inf
        %368 = vst.msk [vmem:[#allocation3] sm:$0xff] %vm351, 0.0
        %369 = vst.msk [vmem:[#allocation3 + $0x8] sm:$0xff] %vm351, 0.0
        %370 = vst.msk [vmem:[#allocation3 + $0x10] sm:$0xff] %vm351, 0.0
        %371 = vst.msk [vmem:[#allocation3 + $0x18] sm:$0xff] %vm351, 0.0
        %372 = vst.msk [vmem:[#allocation3 + $0x20] sm:$0xff] %vm351, 0.0
        %373 = vst.msk [vmem:[#allocation3 + $0x28] sm:$0xff] %vm351, 0.0
        %374 = vst.msk [vmem:[#allocation3 + $0x30] sm:$0xff] %vm351, 0.0
        %375 = vst.msk [vmem:[#allocation3 + $0x38] sm:$0xff] %vm351, 0.0
        %376 = vst.msk [vmem:[#allocation3 + $0x40] sm:$0xff] %vm351, 0.0
        %377 = vst.msk [vmem:[#allocation3 + $0x48] sm:$0xff] %vm351, 0.0
        %378 = vst.msk [vmem:[#allocation3 + $0x50] sm:$0xff] %vm351, 0.0
        %379 = vst.msk [vmem:[#allocation3 + $0x58] sm:$0xff] %vm351, 0.0
        %380 = vst.msk [vmem:[#allocation3 + $0x60] sm:$0xff] %vm351, 0.0
        %381 = vst.msk [vmem:[#allocation3 + $0x68] sm:$0xff] %vm351, 0.0
        %382 = vst.msk [vmem:[#allocation3 + $0x70] sm:$0xff] %vm351, 0.0
        %383 = vst.msk [vmem:[#allocation3 + $0x78] sm:$0xff] %vm351, 0.0
        %vm384 = vcmask 130048
        %385 = vst.msk [vmem:[#allocation4] sm:$0xff] %vm384, 0.0
        %386 = vst.msk [vmem:[#allocation4 + $0x8] sm:$0xff] %vm384, 0.0
        %387 = vst.msk [vmem:[#allocation4 + $0x10] sm:$0xff] %vm384, 0.0
        %388 = vst.msk [vmem:[#allocation4 + $0x18] sm:$0xff] %vm384, 0.0
        %389 = vst.msk [vmem:[#allocation4 + $0x20] sm:$0xff] %vm384, 0.0
        %390 = vst.msk [vmem:[#allocation4 + $0x28] sm:$0xff] %vm384, 0.0
        %391 = vst.msk [vmem:[#allocation4 + $0x30] sm:$0xff] %vm384, 0.0
        %392 = vst.msk [vmem:[#allocation4 + $0x38] sm:$0xff] %vm384, 0.0
        %393 = vst.msk [vmem:[#allocation4 + $0x40] sm:$0xff] %vm384, 0.0
        %394 = vst.msk [vmem:[#allocation4 + $0x48] sm:$0xff] %vm384, 0.0
        %395 = vst.msk [vmem:[#allocation4 + $0x50] sm:$0xff] %vm384, 0.0
        %396 = vst.msk [vmem:[#allocation4 + $0x58] sm:$0xff] %vm384, 0.0
        %397 = vst.msk [vmem:[#allocation4 + $0x60] sm:$0xff] %vm384, 0.0
        %398 = vst.msk [vmem:[#allocation4 + $0x68] sm:$0xff] %vm384, 0.0
        %399 = vst.msk [vmem:[#allocation4 + $0x70] sm:$0xff] %vm384, 0.0
        %400 = vst.msk [vmem:[#allocation4 + $0x78] sm:$0xff] %vm384, 0.0
      $region40: #{tpu_custom_call.1} parent=35 // pred_fallthru
        _
      %v401 = vld [vmem:[%s307] sm:$0xf]
      %v402 = vld [vmem:[%s307 + $0x4] sm:$0xf]
      %v403 = vld [vmem:[%s307 + $0x8] sm:$0xf]
      %v404 = vld [vmem:[%s307 + $0xc] sm:$0xf]
      %v405 = vld [vmem:[%s307 + $0x10] sm:$0xf]
      %v406 = vld [vmem:[%s307 + $0x14] sm:$0xf]
      %v407 = vld [vmem:[%s307 + $0x18] sm:$0xf]
      %v408 = vld [vmem:[%s307 + $0x1c] sm:$0xf]
      %v409 = vld [vmem:[%s307 + $0x20] sm:$0xf]
      %v410 = vld [vmem:[%s307 + $0x24] sm:$0xf]
      %v411 = vld [vmem:[%s307 + $0x28] sm:$0xf]
      %v412 = vld [vmem:[%s307 + $0x2c] sm:$0xf]
      %v413 = vld [vmem:[%s307 + $0x30] sm:$0xf]
      %v414 = vld [vmem:[%s307 + $0x34] sm:$0xf]
      %v415 = vld [vmem:[%s307 + $0x38] sm:$0xf]
      %v416 = vld [vmem:[%s307 + $0x3c] sm:$0xf]
      %v417 = vld [vmem:[%s315] sm:$0x1]
      %v434 = vunpack.c.l.b16 %v401
      %v435 = vunpack.c.l.b16 %v402
      %v436 = vunpack.c.l.b16 %v403
      %v437 = vunpack.c.l.b16 %v404
      %v438 = vunpack.c.l.b16 %v405
      %v439 = vunpack.c.l.b16 %v406
      %v440 = vunpack.c.l.b16 %v407
      %v441 = vunpack.c.l.b16 %v408
      %v442 = vunpack.c.l.b16 %v409
      %v443 = vunpack.c.l.b16 %v410
      %v444 = vunpack.c.l.b16 %v411
      %v445 = vunpack.c.l.b16 %v412
      %v446 = vunpack.c.l.b16 %v413
      %v447 = vunpack.c.l.b16 %v414
      %v448 = vunpack.c.l.b16 %v415
      %v449 = vunpack.c.l.b16 %v416
      %v450 = vpack.c.b16 %v435, %v434
      %v451 = vpack.c.b16 %v437, %v436
      %v452 = vpack.c.b16 %v439, %v438
      %v453 = vpack.c.b16 %v441, %v440
      %v454 = vpack.c.b16 %v443, %v442
      %v455 = vpack.c.b16 %v445, %v444
      %v456 = vpack.c.b16 %v447, %v446
      %v457 = vpack.c.b16 %v449, %v448
      %vm458 = vcmask 15360
      %v460 = vsel %vm458, %v450, 0
      %v463 = vsel %vm458, %v451, 0
      %v466 = vsel %vm458, %v452, 0
      %v469 = vsel %vm458, %v453, 0
      %v472 = vsel %vm458, %v454, 0
      %v475 = vsel %vm458, %v455, 0
      %v478 = vsel %vm458, %v456, 0
      %v481 = vsel %vm458, %v457, 0
      %vm483 = vcmask 1040384
      %v485 = vsel %vm483, %v417, 0
      %487 = vmatprep.subr.bf16.mxu0 0
      %488 = vmatpush1.bf16.msra.mxu0 %v485
      %489 = vmatprep.subr.bf16.mxu0 0
      %490 = vmatpush1.bf16.msra.mxu0 0
      %491 = vmatprep.subr.bf16.mxu0 0
      %492 = vmatpush1.bf16.msra.mxu0 0
      %493 = vmatprep.subr.bf16.mxu0 0
      %494 = vmatpush1.bf16.msra.mxu0 0
      %495 = vmatprep.subr.bf16.mxu0 0
      %496 = vmatpush1.bf16.msra.mxu0 0
      %497 = vmatprep.subr.bf16.mxu0 0
      %498 = vmatpush1.bf16.msra.mxu0 0
      %499 = vmatprep.subr.bf16.mxu0 0
      %500 = vmatpush1.bf16.msra.mxu0 0
      %501 = vmatprep.subr.bf16.mxu0 0
      %502 = vmatpush1.bf16.msra.mxu0 0
      %503 = vmatprep.subr.bf16.mxu0 0
      %504 = vmatpush1.bf16.msra.mxu0 0
      %505 = vmatprep.subr.bf16.mxu0 0
      %506 = vmatpush1.bf16.msra.mxu0 0
      %507 = vmatprep.subr.bf16.mxu0 0
      %508 = vmatpush1.bf16.msra.mxu0 0
      %509 = vmatprep.subr.bf16.mxu0 0
      %510 = vmatpush1.bf16.msra.mxu0 0
      %511 = vmatprep.subr.bf16.mxu0 0
      %512 = vmatpush1.bf16.msra.mxu0 0
      %513 = vmatprep.subr.bf16.mxu0 0
      %514 = vmatpush1.bf16.msra.mxu0 0
      %515 = vmatprep.subr.bf16.mxu0 0
      %516 = vmatpush1.bf16.msra.mxu0 0
      %517 = vmatprep.subr.bf16.mxu0 0
      %518 = vmatpush1.bf16.msra.mxu0 0
      %519 = vmatprep.mubr.bf16.mxu0 0
      %520 = vmatmul.mubr.bf16.gmra.mrb[0].mxu0 %v460
      %v521 = vpop.f32.mrb[0].mxu0
      %v522 = vadd.f32 0.0, %v521
      %v523 = vpop.f32.mrb[0].mxu0
      %v524 = vpop.f32.mrb[0].mxu0
      %v525 = vadd.f32 0.0, %v524
      %v526 = vpop.f32.mrb[0].mxu0
      %527 = vmatprep.mubr.bf16.mxu0 0
      %528 = vmatmul.mubr.bf16.gmra.mrb[0].mxu0 %v463
      %v529 = vpop.f32.mrb[0].mxu0
      %v530 = vadd.f32 0.0, %v529
      %v531 = vpop.f32.mrb[0].mxu0
      %v532 = vpop.f32.mrb[0].mxu0
      %v533 = vadd.f32 0.0, %v532
      %v534 = vpop.f32.mrb[0].mxu0
      %535 = vmatprep.mubr.bf16.mxu0 0
      %536 = vmatmul.mubr.bf16.gmra.mrb[0].mxu0 %v466
      %v537 = vpop.f32.mrb[0].mxu0
      %v538 = vadd.f32 0.0, %v537
      %v539 = vpop.f32.mrb[0].mxu0
      %v540 = vpop.f32.mrb[0].mxu0
      %v541 = vadd.f32 0.0, %v540
      %v542 = vpop.f32.mrb[0].mxu0
      %543 = vmatprep.mubr.bf16.mxu0 0
      %544 = vmatmul.mubr.bf16.gmra.mrb[0].mxu0 %v469
      %v545 = vpop.f32.mrb[0].mxu0
      %v546 = vadd.f32 0.0, %v545
      %v547 = vpop.f32.mrb[0].mxu0
      %v548 = vpop.f32.mrb[0].mxu0
      %v549 = vadd.f32 0.0, %v548
      %v550 = vpop.f32.mrb[0].mxu0
      %551 = vmatprep.mubr.bf16.mxu0 0
      %552 = vmatmul.mubr.bf16.gmra.mrb[0].mxu0 %v472
      %v553 = vpop.f32.mrb[0].mxu0
      %v554 = vadd.f32 0.0, %v553
      %v555 = vpop.f32.mrb[0].mxu0
      %v556 = vpop.f32.mrb[0].mxu0
      %v557 = vadd.f32 0.0, %v556
      %v558 = vpop.f32.mrb[0].mxu0
      %559 = vmatprep.mubr.bf16.mxu0 0
      %560 = vmatmul.mubr.bf16.gmra.mrb[0].mxu0 %v475
      %v561 = vpop.f32.mrb[0].mxu0
      %v562 = vadd.f32 0.0, %v561
      %v563 = vpop.f32.mrb[0].mxu0
      %v564 = vpop.f32.mrb[0].mxu0
      %v565 = vadd.f32 0.0, %v564
      %v566 = vpop.f32.mrb[0].mxu0
      %567 = vmatprep.mubr.bf16.mxu0 0
      %568 = vmatmul.mubr.bf16.gmra.mrb[0].mxu0 %v478
      %v569 = vpop.f32.mrb[0].mxu0
      %v570 = vadd.f32 0.0, %v569
      %v571 = vpop.f32.mrb[0].mxu0
      %v572 = vpop.f32.mrb[0].mxu0
      %v573 = vadd.f32 0.0, %v572
      %v574 = vpop.f32.mrb[0].mxu0
      %575 = vmatprep.mubr.bf16.mxu0 0
      %576 = vmatmul.mubr.bf16.gmra.mrb[0].mxu0 %v481
      %v577 = vpop.f32.mrb[0].mxu0
      %v578 = vadd.f32 0.0, %v577
      %v579 = vpop.f32.mrb[0].mxu0
      %v580 = vpop.f32.mrb[0].mxu0
      %v581 = vadd.f32 0.0, %v580
      %v582 = vpop.f32.mrb[0].mxu0
      %583 = vdwg.mxu0
      %v584 = vld [vmem:[#allocation2] sm:$0xff]
      %v585 = vld [vmem:[#allocation2 + $0x8] sm:$0xff]
      %v586 = vld [vmem:[#allocation2 + $0x10] sm:$0xff]
      %v587 = vld [vmem:[#allocation2 + $0x18] sm:$0xff]
      %v588 = vld [vmem:[#allocation2 + $0x20] sm:$0xff]
      %v589 = vld [vmem:[#allocation2 + $0x28] sm:$0xff]
      %v590 = vld [vmem:[#allocation2 + $0x30] sm:$0xff]
      %v591 = vld [vmem:[#allocation2 + $0x38] sm:$0xff]
      %v592 = vld [vmem:[#allocation2 + $0x40] sm:$0xff]
      %v593 = vld [vmem:[#allocation2 + $0x48] sm:$0xff]
      %v594 = vld [vmem:[#allocation2 + $0x50] sm:$0xff]
      %v595 = vld [vmem:[#allocation2 + $0x58] sm:$0xff]
      %v596 = vld [vmem:[#allocation2 + $0x60] sm:$0xff]
      %v597 = vld [vmem:[#allocation2 + $0x68] sm:$0xff]
      %v598 = vld [vmem:[#allocation2 + $0x70] sm:$0xff]
      %v599 = vld [vmem:[#allocation2 + $0x78] sm:$0xff]
      %600 = vmax.xlane.f32.xlu0 %v522
      %v601 = vpop.xlane.xlu0 %600
      %602 = vmax.xlane.f32.xlu0 %v525
      %v603 = vpop.xlane.xlu0 %602
      %604 = vmax.xlane.f32.xlu0 %v530
      %v605 = vpop.xlane.xlu0 %604
      %606 = vmax.xlane.f32.xlu0 %v533
      %v607 = vpop.xlane.xlu0 %606
      %608 = vmax.xlane.f32.xlu0 %v538
      %v609 = vpop.xlane.xlu0 %608
      %610 = vmax.xlane.f32.xlu0 %v541
      %v611 = vpop.xlane.xlu0 %610
      %612 = vmax.xlane.f32.xlu0 %v546
      %v613 = vpop.xlane.xlu0 %612
      %614 = vmax.xlane.f32.xlu0 %v549
      %v615 = vpop.xlane.xlu0 %614
      %616 = vmax.xlane.f32.xlu0 %v554
      %v617 = vpop.xlane.xlu0 %616
      %618 = vmax.xlane.f32.xlu0 %v557
      %v619 = vpop.xlane.xlu0 %618
      %620 = vmax.xlane.f32.xlu0 %v562
      %v621 = vpop.xlane.xlu0 %620
      %622 = vmax.xlane.f32.xlu0 %v565
      %v623 = vpop.xlane.xlu0 %622
      %624 = vmax.xlane.f32.xlu0 %v570
      %v625 = vpop.xlane.xlu0 %624
      %626 = vmax.xlane.f32.xlu0 %v573
      %v627 = vpop.xlane.xlu0 %626
      %628 = vmax.xlane.f32.xlu0 %v578
      %v629 = vpop.xlane.xlu0 %628
      %630 = vmax.xlane.f32.xlu0 %v581
      %v631 = vpop.xlane.xlu0 %630
      %v632 = vmax.f32 %v584, %v601
      %v633 = vmax.f32 %v585, %v603
      %v634 = vmax.f32 %v586, %v605
      %v635 = vmax.f32 %v587, %v607
      %v636 = vmax.f32 %v588, %v609
      %v637 = vmax.f32 %v589, %v611
      %v638 = vmax.f32 %v590, %v613
      %v639 = vmax.f32 %v591, %v615
      %v640 = vmax.f32 %v592, %v617
      %v641 = vmax.f32 %v593, %v619
      %v642 = vmax.f32 %v594, %v621
      %v643 = vmax.f32 %v595, %v623
      %v644 = vmax.f32 %v596, %v625
      %v645 = vmax.f32 %v597, %v627
      %v646 = vmax.f32 %v598, %v629
      %v647 = vmax.f32 %v599, %v631
      %v648 = vsub.f32 %v584, %v632
      %v649 = vsub.f32 %v585, %v633
      %v650 = vsub.f32 %v586, %v634
      %v651 = vsub.f32 %v587, %v635
      %v652 = vsub.f32 %v588, %v636
      %v653 = vsub.f32 %v589, %v637
      %v654 = vsub.f32 %v590, %v638
      %v655 = vsub.f32 %v591, %v639
      %v656 = vsub.f32 %v592, %v640
      %v657 = vsub.f32 %v593, %v641
      %v658 = vsub.f32 %v594, %v642
      %v659 = vsub.f32 %v595, %v643
      %v660 = vsub.f32 %v596, %v644
      %v661 = vsub.f32 %v597, %v645
      %v662 = vsub.f32 %v598, %v646
      %v663 = vsub.f32 %v599, %v647
      %v664 = vmul.f32 %v648, 1.442695
      %v665 = vpow.pop %v664
      %v666 = vmul.f32 %v649, 1.442695
      %v667 = vpow.pop %v666
      %v668 = vmul.f32 %v650, 1.442695
      %v669 = vpow.pop %v668
      %v670 = vmul.f32 %v651, 1.442695
      %v671 = vpow.pop %v670
      %v672 = vmul.f32 %v652, 1.442695
      %v673 = vpow.pop %v672
      %v674 = vmul.f32 %v653, 1.442695
      %v675 = vpow.pop %v674
      %v676 = vmul.f32 %v654, 1.442695
      %v677 = vpow.pop %v676
      %v678 = vmul.f32 %v655, 1.442695
      %v679 = vpow.pop %v678
      %v680 = vmul.f32 %v656, 1.442695
      %v681 = vpow.pop %v680
      %v682 = vmul.f32 %v657, 1.442695
      %v683 = vpow.pop %v682
      %v684 = vmul.f32 %v658, 1.442695
      %v685 = vpow.pop %v684
      %v686 = vmul.f32 %v659, 1.442695
      %v687 = vpow.pop %v686
      %v688 = vmul.f32 %v660, 1.442695
      %v689 = vpow.pop %v688
      %v690 = vmul.f32 %v661, 1.442695
      %v691 = vpow.pop %v690
      %v692 = vmul.f32 %v662, 1.442695
      %v693 = vpow.pop %v692
      %v694 = vmul.f32 %v663, 1.442695
      %v695 = vpow.pop %v694
      %697 = vset.pattern.permute.xlu0 0
      %698 = vperm.xlu0 %697, %v632
      %v699 = vpop.permute.xlu0 %698
      %702 = vset.pattern.permute.xlu0 0
      %703 = vperm.xlu0 %702, %v633
      %v704 = vpop.permute.xlu0 %703
      %707 = vset.pattern.permute.xlu0 0
      %708 = vperm.xlu0 %707, %v634
      %v709 = vpop.permute.xlu0 %708
      %712 = vset.pattern.permute.xlu0 0
      %713 = vperm.xlu0 %712, %v635
      %v714 = vpop.permute.xlu0 %713
      %717 = vset.pattern.permute.xlu0 0
      %718 = vperm.xlu0 %717, %v636
      %v719 = vpop.permute.xlu0 %718
      %722 = vset.pattern.permute.xlu0 0
      %723 = vperm.xlu0 %722, %v637
      %v724 = vpop.permute.xlu0 %723
      %727 = vset.pattern.permute.xlu0 0
      %728 = vperm.xlu0 %727, %v638
      %v729 = vpop.permute.xlu0 %728
      %732 = vset.pattern.permute.xlu0 0
      %733 = vperm.xlu0 %732, %v639
      %v734 = vpop.permute.xlu0 %733
      %737 = vset.pattern.permute.xlu0 0
      %738 = vperm.xlu0 %737, %v640
      %v739 = vpop.permute.xlu0 %738
      %742 = vset.pattern.permute.xlu0 0
      %743 = vperm.xlu0 %742, %v641
      %v744 = vpop.permute.xlu0 %743
      %747 = vset.pattern.permute.xlu0 0
      %748 = vperm.xlu0 %747, %v642
      %v749 = vpop.permute.xlu0 %748
      %752 = vset.pattern.permute.xlu0 0
      %753 = vperm.xlu0 %752, %v643
      %v754 = vpop.permute.xlu0 %753
      %757 = vset.pattern.permute.xlu0 0
      %758 = vperm.xlu0 %757, %v644
      %v759 = vpop.permute.xlu0 %758
      %762 = vset.pattern.permute.xlu0 0
      %763 = vperm.xlu0 %762, %v645
      %v764 = vpop.permute.xlu0 %763
      %767 = vset.pattern.permute.xlu0 0
      %768 = vperm.xlu0 %767, %v646
      %v769 = vpop.permute.xlu0 %768
      %772 = vset.pattern.permute.xlu0 0
      %773 = vperm.xlu0 %772, %v647
      %v774 = vpop.permute.xlu0 %773
      %v776 = vsub.f32 %v522, %v699
      %v777 = vsub.f32 %v525, %v704
      %v778 = vsub.f32 %v530, %v709
      %v779 = vsub.f32 %v533, %v714
      %v780 = vsub.f32 %v538, %v719
      %v781 = vsub.f32 %v541, %v724
      %v782 = vsub.f32 %v546, %v729
      %v783 = vsub.f32 %v549, %v734
      %v784 = vsub.f32 %v554, %v739
      %v785 = vsub.f32 %v557, %v744
      %v786 = vsub.f32 %v562, %v749
      %v787 = vsub.f32 %v565, %v754
      %v788 = vsub.f32 %v570, %v759
      %v789 = vsub.f32 %v573, %v764
      %v790 = vsub.f32 %v578, %v769
      %v791 = vsub.f32 %v581, %v774
      %v792 = vmul.f32 %v776, 1.442695
      %v793 = vpow.pop %v792
      %v794 = vmul.f32 %v777, 1.442695
      %v795 = vpow.pop %v794
      %v796 = vmul.f32 %v778, 1.442695
      %v797 = vpow.pop %v796
      %v798 = vmul.f32 %v779, 1.442695
      %v799 = vpow.pop %v798
      %v800 = vmul.f32 %v780, 1.442695
      %v801 = vpow.pop %v800
      %v802 = vmul.f32 %v781, 1.442695
      %v803 = vpow.pop %v802
      %v804 = vmul.f32 %v782, 1.442695
      %v805 = vpow.pop %v804
      %v806 = vmul.f32 %v783, 1.442695
      %v807 = vpow.pop %v806
      %v808 = vmul.f32 %v784, 1.442695
      %v809 = vpow.pop %v808
      %v810 = vmul.f32 %v785, 1.442695
      %v811 = vpow.pop %v810
      %v812 = vmul.f32 %v786, 1.442695
      %v813 = vpow.pop %v812
      %v814 = vmul.f32 %v787, 1.442695
      %v815 = vpow.pop %v814
      %v816 = vmul.f32 %v788, 1.442695
      %v817 = vpow.pop %v816
      %v818 = vmul.f32 %v789, 1.442695
      %v819 = vpow.pop %v818
      %v820 = vmul.f32 %v790, 1.442695
      %v821 = vpow.pop %v820
      %v822 = vmul.f32 %v791, 1.442695
      %v823 = vpow.pop %v822
      %v824 = vld [vmem:[#allocation3] sm:$0xff]
      %v825 = vld [vmem:[#allocation3 + $0x8] sm:$0xff]
      %v826 = vld [vmem:[#allocation3 + $0x10] sm:$0xff]
      %v827 = vld [vmem:[#allocation3 + $0x18] sm:$0xff]
      %v828 = vld [vmem:[#allocation3 + $0x20] sm:$0xff]
      %v829 = vld [vmem:[#allocation3 + $0x28] sm:$0xff]
      %v830 = vld [vmem:[#allocation3 + $0x30] sm:$0xff]
      %v831 = vld [vmem:[#allocation3 + $0x38] sm:$0xff]
      %v832 = vld [vmem:[#allocation3 + $0x40] sm:$0xff]
      %v833 = vld [vmem:[#allocation3 + $0x48] sm:$0xff]
      %v834 = vld [vmem:[#allocation3 + $0x50] sm:$0xff]
      %v835 = vld [vmem:[#allocation3 + $0x58] sm:$0xff]
      %v836 = vld [vmem:[#allocation3 + $0x60] sm:$0xff]
      %v837 = vld [vmem:[#allocation3 + $0x68] sm:$0xff]
      %v838 = vld [vmem:[#allocation3 + $0x70] sm:$0xff]
      %v839 = vld [vmem:[#allocation3 + $0x78] sm:$0xff]
      %v840 = vmul.f32 %v665, %v824
      %v841 = vmul.f32 %v667, %v825
      %v842 = vmul.f32 %v669, %v826
      %v843 = vmul.f32 %v671, %v827
      %v844 = vmul.f32 %v673, %v828
      %v845 = vmul.f32 %v675, %v829
      %v846 = vmul.f32 %v677, %v830
      %v847 = vmul.f32 %v679, %v831
      %v848 = vmul.f32 %v681, %v832
      %v849 = vmul.f32 %v683, %v833
      %v850 = vmul.f32 %v685, %v834
      %v851 = vmul.f32 %v687, %v835
      %v852 = vmul.f32 %v689, %v836
      %v853 = vmul.f32 %v691, %v837
      %v854 = vmul.f32 %v693, %v838
      %v855 = vmul.f32 %v695, %v839
      %856 = vadd.xlane.f32.xlu0 %v793
      %v857 = vpop.xlane.xlu0 %856
      %858 = vadd.xlane.f32.xlu0 %v795
      %v859 = vpop.xlane.xlu0 %858
      %860 = vadd.xlane.f32.xlu0 %v797
      %v861 = vpop.xlane.xlu0 %860
      %862 = vadd.xlane.f32.xlu0 %v799
      %v863 = vpop.xlane.xlu0 %862
      %864 = vadd.xlane.f32.xlu0 %v801
      %v865 = vpop.xlane.xlu0 %864
      %866 = vadd.xlane.f32.xlu0 %v803
      %v867 = vpop.xlane.xlu0 %866
      %868 = vadd.xlane.f32.xlu0 %v805
      %v869 = vpop.xlane.xlu0 %868
      %870 = vadd.xlane.f32.xlu0 %v807
      %v871 = vpop.xlane.xlu0 %870
      %872 = vadd.xlane.f32.xlu0 %v809
      %v873 = vpop.xlane.xlu0 %872
      %874 = vadd.xlane.f32.xlu0 %v811
      %v875 = vpop.xlane.xlu0 %874
      %876 = vadd.xlane.f32.xlu0 %v813
      %v877 = vpop.xlane.xlu0 %876
      %878 = vadd.xlane.f32.xlu0 %v815
      %v879 = vpop.xlane.xlu0 %878
      %880 = vadd.xlane.f32.xlu0 %v817
      %v881 = vpop.xlane.xlu0 %880
      %882 = vadd.xlane.f32.xlu0 %v819
      %v883 = vpop.xlane.xlu0 %882
      %884 = vadd.xlane.f32.xlu0 %v821
      %v885 = vpop.xlane.xlu0 %884
      %886 = vadd.xlane.f32.xlu0 %v823
      %v887 = vpop.xlane.xlu0 %886
      %v888 = vadd.f32 %v840, %v857
      %v889 = vadd.f32 %v841, %v859
      %v890 = vadd.f32 %v842, %v861
      %v891 = vadd.f32 %v843, %v863
      %v892 = vadd.f32 %v844, %v865
      %v893 = vadd.f32 %v845, %v867
      %v894 = vadd.f32 %v846, %v869
      %v895 = vadd.f32 %v847, %v871
      %v896 = vadd.f32 %v848, %v873
      %v897 = vadd.f32 %v849, %v875
      %v898 = vadd.f32 %v850, %v877
      %v899 = vadd.f32 %v851, %v879
      %v900 = vadd.f32 %v852, %v881
      %v901 = vadd.f32 %v853, %v883
      %v902 = vadd.f32 %v854, %v885
      %v903 = vadd.f32 %v855, %v887
      %vm904 = vcmask 7168
      %905 = vst.msk [vmem:[#allocation3] sm:$0xff] %vm904, %v888
      %906 = vst.msk [vmem:[#allocation3 + $0x8] sm:$0xff] %vm904, %v889
      %907 = vst.msk [vmem:[#allocation3 + $0x10] sm:$0xff] %vm904, %v890
      %908 = vst.msk [vmem:[#allocation3 + $0x18] sm:$0xff] %vm904, %v891
      %909 = vst.msk [vmem:[#allocation3 + $0x20] sm:$0xff] %vm904, %v892
      %910 = vst.msk [vmem:[#allocation3 + $0x28] sm:$0xff] %vm904, %v893
      %911 = vst.msk [vmem:[#allocation3 + $0x30] sm:$0xff] %vm904, %v894
      %912 = vst.msk [vmem:[#allocation3 + $0x38] sm:$0xff] %vm904, %v895
      %913 = vst.msk [vmem:[#allocation3 + $0x40] sm:$0xff] %vm904, %v896
      %914 = vst.msk [vmem:[#allocation3 + $0x48] sm:$0xff] %vm904, %v897
      %915 = vst.msk [vmem:[#allocation3 + $0x50] sm:$0xff] %vm904, %v898
      %916 = vst.msk [vmem:[#allocation3 + $0x58] sm:$0xff] %vm904, %v899
      %917 = vst.msk [vmem:[#allocation3 + $0x60] sm:$0xff] %vm904, %v900
      %918 = vst.msk [vmem:[#allocation3 + $0x68] sm:$0xff] %vm904, %v901
      %919 = vst.msk [vmem:[#allocation3 + $0x70] sm:$0xff] %vm904, %v902
      %920 = vst.msk [vmem:[#allocation3 + $0x78] sm:$0xff] %vm904, %v903
      %v921 = vld [vmem:[#allocation4] sm:$0xff]
      %v922 = vld [vmem:[#allocation4 + $0x8] sm:$0xff]
      %v923 = vld [vmem:[#allocation4 + $0x10] sm:$0xff]
      %v924 = vld [vmem:[#allocation4 + $0x18] sm:$0xff]
      %v925 = vld [vmem:[#allocation4 + $0x20] sm:$0xff]
      %v926 = vld [vmem:[#allocation4 + $0x28] sm:$0xff]
      %v927 = vld [vmem:[#allocation4 + $0x30] sm:$0xff]
      %v928 = vld [vmem:[#allocation4 + $0x38] sm:$0xff]
      %v929 = vld [vmem:[#allocation4 + $0x40] sm:$0xff]
      %v930 = vld [vmem:[#allocation4 + $0x48] sm:$0xff]
      %v931 = vld [vmem:[#allocation4 + $0x50] sm:$0xff]
      %v932 = vld [vmem:[#allocation4 + $0x58] sm:$0xff]
      %v933 = vld [vmem:[#allocation4 + $0x60] sm:$0xff]
      %v934 = vld [vmem:[#allocation4 + $0x68] sm:$0xff]
      %v935 = vld [vmem:[#allocation4 + $0x70] sm:$0xff]
      %v936 = vld [vmem:[#allocation4 + $0x78] sm:$0xff]
      %938 = vset.pattern.permute.xlu0 0
      %939 = vperm.xlu0 %938, %v665
      %v940 = vpop.permute.xlu0 %939
      %943 = vset.pattern.permute.xlu0 0
      %944 = vperm.xlu0 %943, %v667
      %v945 = vpop.permute.xlu0 %944
      %948 = vset.pattern.permute.xlu0 0
      %949 = vperm.xlu0 %948, %v669
      %v950 = vpop.permute.xlu0 %949
      %953 = vset.pattern.permute.xlu0 0
      %954 = vperm.xlu0 %953, %v671
      %v955 = vpop.permute.xlu0 %954
      %958 = vset.pattern.permute.xlu0 0
      %959 = vperm.xlu0 %958, %v673
      %v960 = vpop.permute.xlu0 %959
      %963 = vset.pattern.permute.xlu0 0
      %964 = vperm.xlu0 %963, %v675
      %v965 = vpop.permute.xlu0 %964
      %968 = vset.pattern.permute.xlu0 0
      %969 = vperm.xlu0 %968, %v677
      %v970 = vpop.permute.xlu0 %969
      %973 = vset.pattern.permute.xlu0 0
      %974 = vperm.xlu0 %973, %v679
      %v975 = vpop.permute.xlu0 %974
      %978 = vset.pattern.permute.xlu0 0
      %979 = vperm.xlu0 %978, %v681
      %v980 = vpop.permute.xlu0 %979
      %983 = vset.pattern.permute.xlu0 0
      %984 = vperm.xlu0 %983, %v683
      %v985 = vpop.permute.xlu0 %984
      %988 = vset.pattern.permute.xlu0 0
      %989 = vperm.xlu0 %988, %v685
      %v990 = vpop.permute.xlu0 %989
      %993 = vset.pattern.permute.xlu0 0
      %994 = vperm.xlu0 %993, %v687
      %v995 = vpop.permute.xlu0 %994
      %998 = vset.pattern.permute.xlu0 0
      %999 = vperm.xlu0 %998, %v689
      %v1000 = vpop.permute.xlu0 %999
      %1003 = vset.pattern.permute.xlu0 0
      %1004 = vperm.xlu0 %1003, %v691
      %v1005 = vpop.permute.xlu0 %1004
      %1008 = vset.pattern.permute.xlu0 0
      %1009 = vperm.xlu0 %1008, %v693
      %v1010 = vpop.permute.xlu0 %1009
      %1013 = vset.pattern.permute.xlu0 0
      %1014 = vperm.xlu0 %1013, %v695
      %v1015 = vpop.permute.xlu0 %1014
      %v1017 = vmul.f32 %v940, %v921
      %v1018 = vmul.f32 %v945, %v922
      %v1019 = vmul.f32 %v950, %v923
      %v1020 = vmul.f32 %v955, %v924
      %v1021 = vmul.f32 %v960, %v925
      %v1022 = vmul.f32 %v965, %v926
      %v1023 = vmul.f32 %v970, %v927
      %v1024 = vmul.f32 %v975, %v928
      %v1025 = vmul.f32 %v980, %v929
      %v1026 = vmul.f32 %v985, %v930
      %v1027 = vmul.f32 %v990, %v931
      %v1028 = vmul.f32 %v995, %v932
      %v1029 = vmul.f32 %v1000, %v933
      %v1030 = vmul.f32 %v1005, %v934
      %v1031 = vmul.f32 %v1010, %v935
      %v1032 = vmul.f32 %v1015, %v936
      %v1033 = vpack.c.bf16 %v795, %v793
      %v1034 = vpack.c.bf16 %v799, %v797
      %v1035 = vpack.c.bf16 %v803, %v801
      %v1036 = vpack.c.bf16 %v807, %v805
      %v1037 = vpack.c.bf16 %v811, %v809
      %v1038 = vpack.c.bf16 %v815, %v813
      %v1039 = vpack.c.bf16 %v819, %v817
      %v1040 = vpack.c.bf16 %v823, %v821
      %v1041 = vld [vmem:[%s324] sm:$0xf]
      %v1042 = vld [vmem:[%s324 + $0x4] sm:$0xf]
      %v1043 = vld [vmem:[%s324 + $0x8] sm:$0xf]
      %v1044 = vld [vmem:[%s324 + $0xc] sm:$0xf]
      %v1045 = vld [vmem:[%s324 + $0x10] sm:$0xf]
      %v1046 = vld [vmem:[%s324 + $0x14] sm:$0xf]
      %v1047 = vld [vmem:[%s324 + $0x18] sm:$0xf]
      %v1048 = vld [vmem:[%s324 + $0x1c] sm:$0xf]
      %v1049 = vld [vmem:[%s324 + $0x20] sm:$0xf]
      %v1050 = vld [vmem:[%s324 + $0x24] sm:$0xf]
      %v1051 = vld [vmem:[%s324 + $0x28] sm:$0xf]
      %v1052 = vld [vmem:[%s324 + $0x2c] sm:$0xf]
      %v1053 = vld [vmem:[%s324 + $0x30] sm:$0xf]
      %v1054 = vld [vmem:[%s324 + $0x34] sm:$0xf]
      %v1055 = vld [vmem:[%s324 + $0x38] sm:$0xf]
      %v1056 = vld [vmem:[%s324 + $0x3c] sm:$0xf]
      %v1073 = vunpack.c.l.b16 %v1041
      %v1074 = vunpack.c.l.b16 %v1042
      %v1075 = vunpack.c.l.b16 %v1043
      %v1076 = vunpack.c.l.b16 %v1044
      %v1077 = vunpack.c.l.b16 %v1045
      %v1078 = vunpack.c.l.b16 %v1046
      %v1079 = vunpack.c.l.b16 %v1047
      %v1080 = vunpack.c.l.b16 %v1048
      %v1081 = vunpack.c.l.b16 %v1049
      %v1082 = vunpack.c.l.b16 %v1050
      %v1083 = vunpack.c.l.b16 %v1051
      %v1084 = vunpack.c.l.b16 %v1052
      %v1085 = vunpack.c.l.b16 %v1053
      %v1086 = vunpack.c.l.b16 %v1054
      %v1087 = vunpack.c.l.b16 %v1055
      %v1088 = vunpack.c.l.b16 %v1056
      %v1089 = vpack.c.b16 %v1074, %v1073
      %v1090 = vpack.c.b16 %v1076, %v1075
      %v1091 = vpack.c.b16 %v1078, %v1077
      %v1092 = vpack.c.b16 %v1080, %v1079
      %v1093 = vpack.c.b16 %v1082, %v1081
      %v1094 = vpack.c.b16 %v1084, %v1083
      %v1095 = vpack.c.b16 %v1086, %v1085
      %v1096 = vpack.c.b16 %v1088, %v1087
      %1105 = vmatprep.subr.bf16.mxu0 0
      %1106 = vmatpush1.bf16.msra.mxu0 %v1089
      %1107 = vmatprep.subr.bf16.mxu0 0
      %1108 = vmatpush1.bf16.msra.mxu0 %v1090
      %1109 = vmatprep.subr.bf16.mxu0 0
      %1110 = vmatpush1.bf16.msra.mxu0 %v1091
      %1111 = vmatprep.subr.bf16.mxu0 0
      %1112 = vmatpush1.bf16.msra.mxu0 %v1092
      %1113 = vmatprep.subr.bf16.mxu0 0
      %1114 = vmatpush1.bf16.msra.mxu0 %v1093
      %1115 = vmatprep.subr.bf16.mxu0 0
      %1116 = vmatpush1.bf16.msra.mxu0 %v1094
      %1117 = vmatprep.subr.bf16.mxu0 0
      %1118 = vmatpush1.bf16.msra.mxu0 %v1095
      %1119 = vmatprep.subr.bf16.mxu0 0
      %1120 = vmatpush1.bf16.msra.mxu0 %v1096
      %1121 = vmatprep.subr.bf16.mxu0 0
      %1122 = vmatpush1.bf16.msra.mxu0 0
      %1123 = vmatprep.subr.bf16.mxu0 0
      %1124 = vmatpush1.bf16.msra.mxu0 0
      %1125 = vmatprep.subr.bf16.mxu0 0
      %1126 = vmatpush1.bf16.msra.mxu0 0
      %1127 = vmatprep.subr.bf16.mxu0 0
      %1128 = vmatpush1.bf16.msra.mxu0 0
      %1129 = vmatprep.subr.bf16.mxu0 0
      %1130 = vmatpush1.bf16.msra.mxu0 0
      %1131 = vmatprep.subr.bf16.mxu0 0
      %1132 = vmatpush1.bf16.msra.mxu0 0
      %1133 = vmatprep.subr.bf16.mxu0 0
      %1134 = vmatpush1.bf16.msra.mxu0 0
      %1135 = vmatprep.subr.bf16.mxu0 0
      %1136 = vmatpush1.bf16.msra.mxu0 0
      %1137 = vmatprep.mubr.bf16.mxu0 0
      %1138 = vmatmul.mubr.bf16.gmra.mrb[0].mxu0 %v1033
      %v1139 = vpop.f32.mrb[0].mxu0
      %v1140 = vadd.f32 0.0, %v1139
      %v1141 = vpop.f32.mrb[0].mxu0
      %v1142 = vpop.f32.mrb[0].mxu0
      %v1143 = vadd.f32 0.0, %v1142
      %v1144 = vpop.f32.mrb[0].mxu0
      %1145 = vmatprep.mubr.bf16.mxu0 0
      %1146 = vmatmul.mubr.bf16.gmra.mrb[0].mxu0 %v1034
      %v1147 = vpop.f32.mrb[0].mxu0
      %v1148 = vadd.f32 0.0, %v1147
      %v1149 = vpop.f32.mrb[0].mxu0
      %v1150 = vpop.f32.mrb[0].mxu0
      %v1151 = vadd.f32 0.0, %v1150
      %v1152 = vpop.f32.mrb[0].mxu0
      %1153 = vmatprep.mubr.bf16.mxu0 0
      %1154 = vmatmul.mubr.bf16.gmra.mrb[0].mxu0 %v1035
      %v1155 = vpop.f32.mrb[0].mxu0
      %v1156 = vadd.f32 0.0, %v1155
      %v1157 = vpop.f32.mrb[0].mxu0
      %v1158 = vpop.f32.mrb[0].mxu0
      %v1159 = vadd.f32 0.0, %v1158
      %v1160 = vpop.f32.mrb[0].mxu0
      %1161 = vmatprep.mubr.bf16.mxu0 0
      %1162 = vmatmul.mubr.bf16.gmra.mrb[0].mxu0 %v1036
      %v1163 = vpop.f32.mrb[0].mxu0
      %v1164 = vadd.f32 0.0, %v1163
      %v1165 = vpop.f32.mrb[0].mxu0
      %v1166 = vpop.f32.mrb[0].mxu0
      %v1167 = vadd.f32 0.0, %v1166
      %v1168 = vpop.f32.mrb[0].mxu0
      %1169 = vmatprep.mubr.bf16.mxu0 0
      %1170 = vmatmul.mubr.bf16.gmra.mrb[0].mxu0 %v1037
      %v1171 = vpop.f32.mrb[0].mxu0
      %v1172 = vadd.f32 0.0, %v1171
      %v1173 = vpop.f32.mrb[0].mxu0
      %v1174 = vpop.f32.mrb[0].mxu0
      %v1175 = vadd.f32 0.0, %v1174
      %v1176 = vpop.f32.mrb[0].mxu0
      %1177 = vmatprep.mubr.bf16.mxu0 0
      %1178 = vmatmul.mubr.bf16.gmra.mrb[0].mxu0 %v1038
      %v1179 = vpop.f32.mrb[0].mxu0
      %v1180 = vadd.f32 0.0, %v1179
      %v1181 = vpop.f32.mrb[0].mxu0
      %v1182 = vpop.f32.mrb[0].mxu0
      %v1183 = vadd.f32 0.0, %v1182
      %v1184 = vpop.f32.mrb[0].mxu0
      %1185 = vmatprep.mubr.bf16.mxu0 0
      %1186 = vmatmul.mubr.bf16.gmra.mrb[0].mxu0 %v1039
      %v1187 = vpop.f32.mrb[0].mxu0
      %v1188 = vadd.f32 0.0, %v1187
      %v1189 = vpop.f32.mrb[0].mxu0
      %v1190 = vpop.f32.mrb[0].mxu0
      %v1191 = vadd.f32 0.0, %v1190
      %v1192 = vpop.f32.mrb[0].mxu0
      %1193 = vmatprep.mubr.bf16.mxu0 0
      %1194 = vmatmul.mubr.bf16.gmra.mrb[0].mxu0 %v1040
      %v1195 = vpop.f32.mrb[0].mxu0
      %v1196 = vadd.f32 0.0, %v1195
      %v1197 = vpop.f32.mrb[0].mxu0
      %v1198 = vpop.f32.mrb[0].mxu0
      %v1199 = vadd.f32 0.0, %v1198
      %v1200 = vpop.f32.mrb[0].mxu0
      %1201 = vdwg.mxu0
      %v1202 = vadd.f32 %v1017, %v1140
      %v1203 = vadd.f32 %v1018, %v1143
      %v1204 = vadd.f32 %v1019, %v1148
      %v1205 = vadd.f32 %v1020, %v1151
      %v1206 = vadd.f32 %v1021, %v1156
      %v1207 = vadd.f32 %v1022, %v1159
      %v1208 = vadd.f32 %v1023, %v1164
      %v1209 = vadd.f32 %v1024, %v1167
      %v1210 = vadd.f32 %v1025, %v1172
      %v1211 = vadd.f32 %v1026, %v1175
      %v1212 = vadd.f32 %v1027, %v1180
      %v1213 = vadd.f32 %v1028, %v1183
      %v1214 = vadd.f32 %v1029, %v1188
      %v1215 = vadd.f32 %v1030, %v1191
      %v1216 = vadd.f32 %v1031, %v1196
      %v1217 = vadd.f32 %v1032, %v1199
      %vm1218 = vcmask 130048
      %1219 = vst.msk [vmem:[#allocation4] sm:$0xff] %vm1218, %v1202
      %1220 = vst.msk [vmem:[#allocation4 + $0x8] sm:$0xff] %vm1218, %v1203
      %1221 = vst.msk [vmem:[#allocation4 + $0x10] sm:$0xff] %vm1218, %v1204
      %1222 = vst.msk [vmem:[#allocation4 + $0x18] sm:$0xff] %vm1218, %v1205
      %1223 = vst.msk [vmem:[#allocation4 + $0x20] sm:$0xff] %vm1218, %v1206
      %1224 = vst.msk [vmem:[#allocation4 + $0x28] sm:$0xff] %vm1218, %v1207
      %1225 = vst.msk [vmem:[#allocation4 + $0x30] sm:$0xff] %vm1218, %v1208
      %1226 = vst.msk [vmem:[#allocation4 + $0x38] sm:$0xff] %vm1218, %v1209
      %1227 = vst.msk [vmem:[#allocation4 + $0x40] sm:$0xff] %vm1218, %v1210
      %1228 = vst.msk [vmem:[#allocation4 + $0x48] sm:$0xff] %vm1218, %v1211
      %1229 = vst.msk [vmem:[#allocation4 + $0x50] sm:$0xff] %vm1218, %v1212
      %1230 = vst.msk [vmem:[#allocation4 + $0x58] sm:$0xff] %vm1218, %v1213
      %1231 = vst.msk [vmem:[#allocation4 + $0x60] sm:$0xff] %vm1218, %v1214
      %1232 = vst.msk [vmem:[#allocation4 + $0x68] sm:$0xff] %vm1218, %v1215
      %1233 = vst.msk [vmem:[#allocation4 + $0x70] sm:$0xff] %vm1218, %v1216
      %1234 = vst.msk [vmem:[#allocation4 + $0x78] sm:$0xff] %vm1218, %v1217
      %1235 = vst.msk [vmem:[#allocation2] sm:$0xff] %vm904, %v632
      %1236 = vst.msk [vmem:[#allocation2 + $0x8] sm:$0xff] %vm904, %v633
      %1237 = vst.msk [vmem:[#allocation2 + $0x10] sm:$0xff] %vm904, %v634
      %1238 = vst.msk [vmem:[#allocation2 + $0x18] sm:$0xff] %vm904, %v635
      %1239 = vst.msk [vmem:[#allocation2 + $0x20] sm:$0xff] %vm904, %v636
      %1240 = vst.msk [vmem:[#allocation2 + $0x28] sm:$0xff] %vm904, %v637
      %1241 = vst.msk [vmem:[#allocation2 + $0x30] sm:$0xff] %vm904, %v638
      %1242 = vst.msk [vmem:[#allocation2 + $0x38] sm:$0xff] %vm904, %v639
      %1243 = vst.msk [vmem:[#allocation2 + $0x40] sm:$0xff] %vm904, %v640
      %1244 = vst.msk [vmem:[#allocation2 + $0x48] sm:$0xff] %vm904, %v641
      %1245 = vst.msk [vmem:[#allocation2 + $0x50] sm:$0xff] %vm904, %v642
      %1246 = vst.msk [vmem:[#allocation2 + $0x58] sm:$0xff] %vm904, %v643
      %1247 = vst.msk [vmem:[#allocation2 + $0x60] sm:$0xff] %vm904, %v644
      %1248 = vst.msk [vmem:[#allocation2 + $0x68] sm:$0xff] %vm904, %v645
      %1249 = vst.msk [vmem:[#allocation2 + $0x70] sm:$0xff] %vm904, %v646
      %1250 = vst.msk [vmem:[#allocation2 + $0x78] sm:$0xff] %vm904, %v647
      %p1251 = scmp.eq.s32.totalorder %s24, 1
      // Predicated region
      $region41: #{tpu_custom_call.1} parent=35 // pred_check
        %p1252 = pneg %p1251
      $region42: #{tpu_custom_call.1} parent=35 // pred_check_branch
        %1254 = sbr.rel (%p1252) target = $region44
      $region43: #{tpu_custom_call.1} parent=35 // pred_region
        %s1255 = sld [smem:[#allocation6]]
        %v1256 = vld [vmem:[#allocation3] sm:$0xff]
        %v1257 = vld [vmem:[#allocation3 + $0x8] sm:$0xff]
        %v1258 = vld [vmem:[#allocation3 + $0x10] sm:$0xff]
        %v1259 = vld [vmem:[#allocation3 + $0x18] sm:$0xff]
        %v1260 = vld [vmem:[#allocation3 + $0x20] sm:$0xff]
        %v1261 = vld [vmem:[#allocation3 + $0x28] sm:$0xff]
        %v1262 = vld [vmem:[#allocation3 + $0x30] sm:$0xff]
        %v1263 = vld [vmem:[#allocation3 + $0x38] sm:$0xff]
        %v1264 = vld [vmem:[#allocation3 + $0x40] sm:$0xff]
        %v1265 = vld [vmem:[#allocation3 + $0x48] sm:$0xff]
        %v1266 = vld [vmem:[#allocation3 + $0x50] sm:$0xff]
        %v1267 = vld [vmem:[#allocation3 + $0x58] sm:$0xff]
        %v1268 = vld [vmem:[#allocation3 + $0x60] sm:$0xff]
        %v1269 = vld [vmem:[#allocation3 + $0x68] sm:$0xff]
        %v1270 = vld [vmem:[#allocation3 + $0x70] sm:$0xff]
        %v1271 = vld [vmem:[#allocation3 + $0x78] sm:$0xff]
        %v1272 = vrcp.pop %v1256
        %v1273 = vrcp.pop %v1257
        %v1274 = vrcp.pop %v1258
        %v1275 = vrcp.pop %v1259
        %v1276 = vrcp.pop %v1260
        %v1277 = vrcp.pop %v1261
        %v1278 = vrcp.pop %v1262
        %v1279 = vrcp.pop %v1263
        %v1280 = vrcp.pop %v1264
        %v1281 = vrcp.pop %v1265
        %v1282 = vrcp.pop %v1266
        %v1283 = vrcp.pop %v1267
        %v1284 = vrcp.pop %v1268
        %v1285 = vrcp.pop %v1269
        %v1286 = vrcp.pop %v1270
        %v1287 = vrcp.pop %v1271
        %v1288 = vld [vmem:[#allocation4] sm:$0xff]
        %v1289 = vld [vmem:[#allocation4 + $0x8] sm:$0xff]
        %v1290 = vld [vmem:[#allocation4 + $0x10] sm:$0xff]
        %v1291 = vld [vmem:[#allocation4 + $0x18] sm:$0xff]
        %v1292 = vld [vmem:[#allocation4 + $0x20] sm:$0xff]
        %v1293 = vld [vmem:[#allocation4 + $0x28] sm:$0xff]
        %v1294 = vld [vmem:[#allocation4 + $0x30] sm:$0xff]
        %v1295 = vld [vmem:[#allocation4 + $0x38] sm:$0xff]
        %v1296 = vld [vmem:[#allocation4 + $0x40] sm:$0xff]
        %v1297 = vld [vmem:[#allocation4 + $0x48] sm:$0xff]
        %v1298 = vld [vmem:[#allocation4 + $0x50] sm:$0xff]
        %v1299 = vld [vmem:[#allocation4 + $0x58] sm:$0xff]
        %v1300 = vld [vmem:[#allocation4 + $0x60] sm:$0xff]
        %v1301 = vld [vmem:[#allocation4 + $0x68] sm:$0xff]
        %v1302 = vld [vmem:[#allocation4 + $0x70] sm:$0xff]
        %v1303 = vld [vmem:[#allocation4 + $0x78] sm:$0xff]
        %1305 = vset.pattern.permute.xlu0 0
        %1306 = vperm.xlu0 %1305, %v1272
        %v1307 = vpop.permute.xlu0 %1306
        %1310 = vset.pattern.permute.xlu0 0
        %1311 = vperm.xlu0 %1310, %v1273
        %v1312 = vpop.permute.xlu0 %1311
        %1315 = vset.pattern.permute.xlu0 0
        %1316 = vperm.xlu0 %1315, %v1274
        %v1317 = vpop.permute.xlu0 %1316
        %1320 = vset.pattern.permute.xlu0 0
        %1321 = vperm.xlu0 %1320, %v1275
        %v1322 = vpop.permute.xlu0 %1321
        %1325 = vset.pattern.permute.xlu0 0
        %1326 = vperm.xlu0 %1325, %v1276
        %v1327 = vpop.permute.xlu0 %1326
        %1330 = vset.pattern.permute.xlu0 0
        %1331 = vperm.xlu0 %1330, %v1277
        %v1332 = vpop.permute.xlu0 %1331
        %1335 = vset.pattern.permute.xlu0 0
        %1336 = vperm.xlu0 %1335, %v1278
        %v1337 = vpop.permute.xlu0 %1336
        %1340 = vset.pattern.permute.xlu0 0
        %1341 = vperm.xlu0 %1340, %v1279
        %v1342 = vpop.permute.xlu0 %1341
        %1345 = vset.pattern.permute.xlu0 0
        %1346 = vperm.xlu0 %1345, %v1280
        %v1347 = vpop.permute.xlu0 %1346
        %1350 = vset.pattern.permute.xlu0 0
        %1351 = vperm.xlu0 %1350, %v1281
        %v1352 = vpop.permute.xlu0 %1351
        %1355 = vset.pattern.permute.xlu0 0
        %1356 = vperm.xlu0 %1355, %v1282
        %v1357 = vpop.permute.xlu0 %1356
        %1360 = vset.pattern.permute.xlu0 0
        %1361 = vperm.xlu0 %1360, %v1283
        %v1362 = vpop.permute.xlu0 %1361
        %1365 = vset.pattern.permute.xlu0 0
        %1366 = vperm.xlu0 %1365, %v1284
        %v1367 = vpop.permute.xlu0 %1366
        %1370 = vset.pattern.permute.xlu0 0
        %1371 = vperm.xlu0 %1370, %v1285
        %v1372 = vpop.permute.xlu0 %1371
        %1375 = vset.pattern.permute.xlu0 0
        %1376 = vperm.xlu0 %1375, %v1286
        %v1377 = vpop.permute.xlu0 %1376
        %1380 = vset.pattern.permute.xlu0 0
        %1381 = vperm.xlu0 %1380, %v1287
        %v1382 = vpop.permute.xlu0 %1381
        %v1384 = vmul.f32 %v1288, %v1307
        %v1385 = vmul.f32 %v1289, %v1312
        %v1386 = vmul.f32 %v1290, %v1317
        %v1387 = vmul.f32 %v1291, %v1322
        %v1388 = vmul.f32 %v1292, %v1327
        %v1389 = vmul.f32 %v1293, %v1332
        %v1390 = vmul.f32 %v1294, %v1337
        %v1391 = vmul.f32 %v1295, %v1342
        %v1392 = vmul.f32 %v1296, %v1347
        %v1393 = vmul.f32 %v1297, %v1352
        %v1394 = vmul.f32 %v1298, %v1357
        %v1395 = vmul.f32 %v1299, %v1362
        %v1396 = vmul.f32 %v1300, %v1367
        %v1397 = vmul.f32 %v1301, %v1372
        %v1398 = vmul.f32 %v1302, %v1377
        %v1399 = vmul.f32 %v1303, %v1382
        %v1400 = vstv %s1255
        %v1401 = vmul.f32 %v1400, %v1384
        %v1402 = vmul.f32 %v1400, %v1385
        %v1403 = vmul.f32 %v1400, %v1386
        %v1404 = vmul.f32 %v1400, %v1387
        %v1405 = vmul.f32 %v1400, %v1388
        %v1406 = vmul.f32 %v1400, %v1389
        %v1407 = vmul.f32 %v1400, %v1390
        %v1408 = vmul.f32 %v1400, %v1391
        %v1409 = vmul.f32 %v1400, %v1392
        %v1410 = vmul.f32 %v1400, %v1393
        %v1411 = vmul.f32 %v1400, %v1394
        %v1412 = vmul.f32 %v1400, %v1395
        %v1413 = vmul.f32 %v1400, %v1396
        %v1414 = vmul.f32 %v1400, %v1397
        %v1415 = vmul.f32 %v1400, %v1398
        %v1416 = vmul.f32 %v1400, %v1399
        %v1417 = vld [vmem:[%s334] sm:$0xff]
        %v1418 = vld [vmem:[%s334 + $0x8] sm:$0xff]
        %v1419 = vld [vmem:[%s334 + $0x10] sm:$0xff]
        %v1420 = vld [vmem:[%s334 + $0x18] sm:$0xff]
        %v1421 = vld [vmem:[%s334 + $0x20] sm:$0xff]
        %v1422 = vld [vmem:[%s334 + $0x28] sm:$0xff]
        %v1423 = vld [vmem:[%s334 + $0x30] sm:$0xff]
        %v1424 = vld [vmem:[%s334 + $0x38] sm:$0xff]
        %v1425 = vld [vmem:[%s334 + $0x40] sm:$0xff]
        %v1426 = vld [vmem:[%s334 + $0x48] sm:$0xff]
        %v1427 = vld [vmem:[%s334 + $0x50] sm:$0xff]
        %v1428 = vld [vmem:[%s334 + $0x58] sm:$0xff]
        %v1429 = vld [vmem:[%s334 + $0x60] sm:$0xff]
        %v1430 = vld [vmem:[%s334 + $0x68] sm:$0xff]
        %v1431 = vld [vmem:[%s334 + $0x70] sm:$0xff]
        %v1432 = vld [vmem:[%s334 + $0x78] sm:$0xff]
        %v1433 = vadd.f32 %v1401, %v1417
        %v1434 = vadd.f32 %v1402, %v1418
        %v1435 = vadd.f32 %v1403, %v1419
        %v1436 = vadd.f32 %v1404, %v1420
        %v1437 = vadd.f32 %v1405, %v1421
        %v1438 = vadd.f32 %v1406, %v1422
        %v1439 = vadd.f32 %v1407, %v1423
        %v1440 = vadd.f32 %v1408, %v1424
        %v1441 = vadd.f32 %v1409, %v1425
        %v1442 = vadd.f32 %v1410, %v1426
        %v1443 = vadd.f32 %v1411, %v1427
        %v1444 = vadd.f32 %v1412, %v1428
        %v1445 = vadd.f32 %v1413, %v1429
        %v1446 = vadd.f32 %v1414, %v1430
        %v1447 = vadd.f32 %v1415, %v1431
        %v1448 = vadd.f32 %v1416, %v1432
        %1449 = vst.msk [vmem:[%s344] sm:$0xff] %vm1218, %v1433
        %1450 = vst.msk [vmem:[%s344 + $0x8] sm:$0xff] %vm1218, %v1434
        %1451 = vst.msk [vmem:[%s344 + $0x10] sm:$0xff] %vm1218, %v1435
        %1452 = vst.msk [vmem:[%s344 + $0x18] sm:$0xff] %vm1218, %v1436
        %1453 = vst.msk [vmem:[%s344 + $0x20] sm:$0xff] %vm1218, %v1437
        %1454 = vst.msk [vmem:[%s344 + $0x28] sm:$0xff] %vm1218, %v1438
        %1455 = vst.msk [vmem:[%s344 + $0x30] sm:$0xff] %vm1218, %v1439
        %1456 = vst.msk [vmem:[%s344 + $0x38] sm:$0xff] %vm1218, %v1440
        %1457 = vst.msk [vmem:[%s344 + $0x40] sm:$0xff] %vm1218, %v1441
        %1458 = vst.msk [vmem:[%s344 + $0x48] sm:$0xff] %vm1218, %v1442
        %1459 = vst.msk [vmem:[%s344 + $0x50] sm:$0xff] %vm1218, %v1443
        %1460 = vst.msk [vmem:[%s344 + $0x58] sm:$0xff] %vm1218, %v1444
        %1461 = vst.msk [vmem:[%s344 + $0x60] sm:$0xff] %vm1218, %v1445
        %1462 = vst.msk [vmem:[%s344 + $0x68] sm:$0xff] %vm1218, %v1446
        %1463 = vst.msk [vmem:[%s344 + $0x70] sm:$0xff] %vm1218, %v1447
        %1464 = vst.msk [vmem:[%s344 + $0x78] sm:$0xff] %vm1218, %v1448
      $region44: #{tpu_custom_call.1} parent=35 // pred_fallthru
        _
      %s1465 = smul.u32 16, %s23
      %p1466 = scmp.lt.s32.totalorder %s22, 1
      %s1467 = scalar_select %p1466, %s22, 1
      %p1468 = scmp.lt.s32.totalorder %s1465, 31
      %s1469 = scalar_select %p1468, %s1465, 31
      %s1470 = smul.addr %s1467, 32
      %s1471 = sadd.s32 %s1469, %s1470
      %s1472 = smul.addr %s1471, 8
      %s1473 = scalar_lea.vmem %s5, %s1472
      // Predicated region
      $region45: #{tpu_custom_call.1} parent=35 // pred_check
        %p1474 = pneg %p168
      $region46: #{tpu_custom_call.1} parent=35 // pred_check_branch
        %1476 = sbr.rel (%p1474) target = $region48
      $region47: #{tpu_custom_call.1} parent=35 // pred_region
        %s1477 = smul.u32 16, %s23
      $region48: #{tpu_custom_call.1} parent=35 // pred_fallthru
        _
    $region36: #{tpu_custom_call.1} parent=5 // pred_fallthru
      _
    %p1478 = scmp.le.s32.totalorder 2, %s12
    // Predicated region
    $region49: #{tpu_custom_call.1} parent=5 // pred_check
      %p1479 = pneg %p1478
    $region50: #{tpu_custom_call.1} parent=5 // pred_check_branch
      %1481 = sbr.rel (%p1479) target = $region52
    $region51: #{tpu_custom_call.1} parent=5 // pred_region
      %s1482 = ssub.s32 %s12, 2
      // Predicated region
      $region53: #{tpu_custom_call.1} parent=51 // pred_check
        %p1483 = pneg %p174
      $region54: #{tpu_custom_call.1} parent=51 // pred_check_branch
        %1485 = sbr.rel (%p1483) target = $region56
      $region55: #{tpu_custom_call.1} parent=51 // pred_region
        %s1486 = smul.u32 16, %s26
        %p1487 = scmp.lt.s32.totalorder %s25, 1
        %s1488 = scalar_select %p1487, %s25, 1
        %p1489 = scmp.lt.s32.totalorder %s1486, 31
        %s1490 = scalar_select %p1489, %s1486, 31
        %s1491 = smul.addr %s1488, 32
        %s1492 = sadd.s32 %s1490, %s1491
        %s1493 = smul.addr %s1492, 8
        %s1494 = scalar_lea.vmem %s5, %s1493
      $region56: #{tpu_custom_call.1} parent=51 // pred_fallthru
        _
    $region52: #{tpu_custom_call.1} parent=5 // pred_fallthru
      _
  $region6: #{tpu_custom_call.1} parent=0 // loop_footer
    %s16 = sadd.s32 1, %s12
  $region7: #{tpu_custom_call.1} parent=0 // loop_footer_branch
    %11 = sbr.rel target = $region3
  $region8: #{tpu_custom_call.1} parent=0 // loop_exit
    _

</llo_original>
